<compile_context>
chip_gen: v7x
topology: tpu7x:2x2x1
jax: 0.10.0
libtpu: 0.0.40
codegen_flags: <defaults>
</compile_context>

<pallas_src>
import jax
import jax.numpy as jnp
from jax.experimental import pallas as pl
from jax.experimental.pallas import tpu as pltpu


# ----------------------------- fused Pallas kernel ---------------------------

def _make_fused_lstm_kernel(num_layers, T, B_pad, D, H, O):
    G = 4 * H

    def kernel(*refs):
        x_ref = refs[0]                          # (T*B_pad, D)   bf16, time-major rows
        lens_ref = refs[1]                       # (B_pad, 1)     int32 (clamped to [1, T])
        w_refs = refs[2:2 + 3 * num_layers]      # per layer: Wih(Din,4H) bf16, Whh(H,4H) bf16, b(1,4H) f32
        fcw_ref = refs[2 + 3 * num_layers]       # (H, O)  f32
        fcb_ref = refs[3 + 3 * num_layers]       # (1, O)  f32
        out_ref = refs[4 + 3 * num_layers]       # (B_pad, O) f32
        xp_scr = refs[5 + 3 * num_layers]        # (T*B_pad, 4H) f32 : hoisted gate pre-activations
        y_scr = refs[6 + 3 * num_layers]         # (T*B_pad, H)  f32 : layer output fed to next layer

        lens_m1 = lens_ref[...] - 1              # (B_pad, 1)

        # Hoisted per-lane constants: one tanh over the whole 4H gate vector.
        # i|f|o blocks use sigmoid(x) = 0.5*tanh(x/2) + 0.5; g block uses plain tanh.
        lane = jax.lax.broadcasted_iota(jnp.int32, (B_pad, G), 1)
        is_g = (lane >= 2 * H) & (lane < 3 * H)
        in_scale = jnp.where(is_g, 1.0, 0.5).astype(jnp.float32)
        out_scale = in_scale
        out_off = jnp.where(is_g, 0.0, 0.5).astype(jnp.float32)

        last_h = jnp.zeros((B_pad, H), jnp.float32)
        for l in range(num_layers):
            wih = w_refs[3 * l][...]             # (Din, 4H) bf16
            whh = w_refs[3 * l + 1][...]         # (H, 4H)   bf16
            bias = w_refs[3 * l + 2][...]        # (1, 4H)   f32
            is_last_layer = (l == num_layers - 1)

            # (1) Input projection for ALL timesteps in one batched MXU matmul
            #     (independent across t, fully off the serial path).
            lhs = x_ref[...] if l == 0 else y_scr[...].astype(jnp.bfloat16)
            xp_scr[...] = jnp.dot(lhs, wih, preferred_element_type=jnp.float32) + bias

            # (2) Serial recurrence: only the fused h @ Whh dot + elementwise per step.
            h = jnp.zeros((B_pad, H), jnp.float32)
            c = jnp.zeros((B_pad, H), jnp.float32)
            for t in range(T):
                row = t * B_pad
                gates = xp_scr[row:row + B_pad, :] + jnp.dot(
                    h.astype(jnp.bfloat16), whh, preferred_element_type=jnp.float32)
                act = jnp.tanh(gates * in_scale) * out_scale + out_off   # single EUP tanh
                i_g = act[:, 0 * H:1 * H]        # PyTorch gate order i | f | g | o
                f_g = act[:, 1 * H:2 * H]
                g_g = act[:, 2 * H:3 * H]
                o_g = act[:, 3 * H:4 * H]
                c = f_g * c + i_g * g_g
                h = o_g * jnp.tanh(c)
                if not is_last_layer:
                    y_scr[row:row + B_pad, :] = h          # only read by the next layer
                else:
                    # packed-sequence "last valid output": capture h at t == lens-1
                    last_h = jnp.where(lens_m1 == t, h, last_h)

        # out_reverse = output[:, 0, H:] is an EMPTY slice (unidirectional LSTM),
        # so out_reduced == last_h. FC head fused here.
        out_ref[...] = (jnp.dot(last_h, fcw_ref[...],
                                preferred_element_type=jnp.float32) + fcb_ref[...])

    return kernel


# ------------------------------ wrapper ---------------------------------------

def lstm_model_forward(inputs_btd, inputs_lens, lstm_params, fc_w, fc_b, hidden_dim):
    """Full forward pass matching LSTM.forward (inputs: (B, T, D), lens: (B,) int)."""
    x = inputs_btd.astype(jnp.float32)
    B, T, D = x.shape
    H = hidden_dim
    O = fc_w.shape[1]
    num_layers = len(lstm_params)

    # Pad batch to a full sublane tile and flatten time-major: row index = t*B_pad + b.
    B_pad = -(-B // 8) * 8
    x_tbd = jnp.transpose(x, (1, 0, 2))                                   # (T, B, D)
    x_tbd = jnp.pad(x_tbd, ((0, 0), (0, B_pad - B), (0, 0)))              # (T, B_pad, D)
    x_flat = x_tbd.reshape(T * B_pad, D).astype(jnp.bfloat16)             # bf16 MXU LHS

    lens = jnp.clip(inputs_lens.astype(jnp.int32), 1, T)                  # guard lens in [1, T]
    lens_b1 = jnp.pad(lens, (0, B_pad - B), constant_values=1).reshape(B_pad, 1)

    flat_w = []
    for (wih, whh, b) in lstm_params:
        flat_w.extend([wih.astype(jnp.bfloat16), whh.astype(jnp.bfloat16),
                       b.astype(jnp.float32)])

    kernel = _make_fused_lstm_kernel(num_layers, T, B_pad, D, H, O)
    n_inputs = 2 + len(flat_w) + 2

    out = pl.pallas_call(
        kernel,
        out_shape=jax.ShapeDtypeStruct((B_pad, O), jnp.float32),
        in_specs=[pl.BlockSpec(memory_space=pltpu.MemorySpace.VMEM)] * n_inputs,
        out_specs=pl.BlockSpec(memory_space=pltpu.MemorySpace.VMEM),
        scratch_shapes=[
            pltpu.VMEM((T * B_pad, 4 * H), jnp.float32),   # hoisted gate pre-activations
            pltpu.VMEM((T * B_pad, H), jnp.float32),       # layer output, fed to next layer
        ],
        compiler_params=pltpu.CompilerParams(vmem_limit_bytes=32 * 1024 * 1024),
    )(x_flat, lens_b1, *flat_w,
      fc_w.astype(jnp.float32), fc_b.reshape(1, O).astype(jnp.float32))

    return out[:B]


# ------------------------- deterministic parameter init ----------------------

def init_params(key, input_dim, hidden_dim, output_dim, layer_num):
    """PyTorch-shaped weights, repacked lane-dense (Din,4H)/(H,4H) for the fused kernel."""
    params = []
    k = 1.0 / jnp.sqrt(hidden_dim)
    d_in = input_dim
    for _ in range(layer_num):
        key, k1, k2, k3, k4 = jax.random.split(key, 5)
        w_ih = jax.random.uniform(k1, (4 * hidden_dim, d_in), jnp.float32, -k, k)
        w_hh = jax.random.uniform(k2, (4 * hidden_dim, hidden_dim), jnp.float32, -k, k)
        b_ih = jax.random.uniform(k3, (4 * hidden_dim,), jnp.float32, -k, k)
        b_hh = jax.random.uniform(k4, (4 * hidden_dim,), jnp.float32, -k, k)
        # (4H, Din) -> (Din, 4H); gate blocks i|f|g|o stay in PyTorch order along 4H.
        params.append((w_ih.T, w_hh.T, (b_ih + b_hh).reshape(1, 4 * hidden_dim)))
        d_in = hidden_dim

    key, k5, k6 = jax.random.split(key, 3)
    kf = 1.0 / jnp.sqrt(hidden_dim)
    fc_w = jax.random.uniform(k5, (output_dim, hidden_dim), jnp.float32, -kf, kf)
    fc_b = jax.random.uniform(k6, (output_dim,), jnp.float32, -kf, kf)
    return params, fc_w.T, fc_b   # fc weight passed transposed: (H, O)


# --------------------------- pure-JAX reference (f32) -------------------------

def reference_forward(x_btd, lens, lstm_params, fc_w, fc_b, hidden_dim):
    B, T, D = x_btd.shape
    H = hidden_dim
    seq = jnp.transpose(x_btd.astype(jnp.float32), (1, 0, 2))   # (T, B, D)
    for (wih, whh, bias) in lstm_params:
        def step(carry, xt):
            h, c = carry
            gates = xt @ wih + h @ whh + bias
            i = jax.nn.sigmoid(gates[:, 0 * H:1 * H])
            f = jax.nn.sigmoid(gates[:, 1 * H:2 * H])
            g = jnp.tanh(gates[:, 2 * H:3 * H])
            o = jax.nn.sigmoid(gates[:, 3 * H:4 * H])
            c = f * c + i * g
            h = o * jnp.tanh(c)
            return (h, c), h
        h0 = jnp.zeros((B, H), jnp.float32)
        _, ys = jax.lax.scan(step, (h0, h0), seq)
        seq = ys
    out_btH = jnp.transpose(seq, (1, 0, 2))
    out_forward = out_btH[jnp.arange(B), lens - 1, :]
    return out_forward @ fc_w + fc_b


# ------------------------------------ main ------------------------------------

if __name__ == "__main__":
    # module hyperparameters (small, consistent with the forward pass)
    input_dim, hidden_dim, output_dim, layer_num, max_frames = 16, 32, 8, 2, 8
    B, T = 2, max_frames

    key = jax.random.PRNGKey(0)
    key, kx = jax.random.split(key)
    inputs = jax.random.normal(kx, (B, T, input_dim), jnp.float32)   # (B, T, D) batch_first
    inputs_lens = jnp.array([6, 8], dtype=jnp.int32)                 # valid lengths per batch

    lstm_params, fc_w, fc_b = init_params(key, input_dim, hidden_dim, output_dim, layer_num)

    out = lstm_model_forward(inputs, inputs_lens, lstm_params, fc_w, fc_b, hidden_dim)
    out = jax.block_until_ready(out)

    ref = reference_forward(inputs, inputs_lens, lstm_params, fc_w, fc_b, hidden_dim)
    assert out.shape == (B, output_dim)
    # Kernel feeds the MXU bf16 weights (f32 accumulation); compare against the f32
    # reference with a correspondingly loosened tolerance.
    assert jnp.allclose(out, ref, atol=5e-2, rtol=5e-2), (out, ref)

    # TODO(synk): self.bn (BatchNorm1d) is unused in the PyTorch forward, so it is not implemented.
    print("KERNEL_OK")
</pallas_src>

<mosaic_0001>
module attributes {stable_mosaic.version = 11 : i64} {
  func.func @kernel(%arg0: memref<64x16xbf16, #tpu.memory_space<vmem>>, %arg1: memref<8x1xi32, #tpu.memory_space<vmem>>, %arg2: memref<16x128xbf16, #tpu.memory_space<vmem>>, %arg3: memref<32x128xbf16, #tpu.memory_space<vmem>>, %arg4: memref<1x128xf32, #tpu.memory_space<vmem>>, %arg5: memref<32x128xbf16, #tpu.memory_space<vmem>>, %arg6: memref<32x128xbf16, #tpu.memory_space<vmem>>, %arg7: memref<1x128xf32, #tpu.memory_space<vmem>>, %arg8: memref<32x8xf32, #tpu.memory_space<vmem>>, %arg9: memref<1x8xf32, #tpu.memory_space<vmem>>, %arg10: memref<8x8xf32, #tpu.memory_space<vmem>>, %arg11: memref<64x128xf32, #tpu.memory_space<vmem>>, %arg12: memref<64x32xf32, #tpu.memory_space<vmem>>) attributes {dimension_semantics = [], scalar_prefetch = 0 : i64, scratch_operands = 2 : i64, tpu.core_type = #tpu.core_type<tc>} {
    %c0 = arith.constant 0 : index
    %c0_0 = arith.constant 0 : index
    %0 = vector.load %arg1[%c0, %c0_0] : memref<8x1xi32, #tpu.memory_space<vmem>>, vector<8x1xi32>
    %c1_i32 = arith.constant 1 : i32
    %1 = vector.broadcast %c1_i32 : i32 to vector<8x1xi32>
    %2 = arith.subi %0, %1 : vector<8x1xi32>
    %3 = tpu.iota {dimensions = array<i32: 1>} : vector<8x128xi32>
    %c64_i32 = arith.constant 64 : i32
    %4 = vector.broadcast %c64_i32 : i32 to vector<8x128xi32>
    %5 = arith.cmpi sge, %3, %4 : vector<8x128xi32>
    %c96_i32 = arith.constant 96 : i32
    %6 = vector.broadcast %c96_i32 : i32 to vector<8x128xi32>
    %7 = arith.cmpi slt, %3, %6 : vector<8x128xi32>
    %8 = arith.andi %5, %7 : vector<8x128xi1>
    %cst = arith.constant 1.000000e+00 : f32
    %cst_1 = arith.constant 5.000000e-01 : f32
    %9 = vector.broadcast %cst : f32 to vector<8x128xf32>
    %10 = vector.broadcast %cst_1 : f32 to vector<8x128xf32>
    %11 = arith.select %8, %9, %10 : vector<8x128xi1>, vector<8x128xf32>
    %cst_2 = arith.constant 0.000000e+00 : f32
    %cst_3 = arith.constant 5.000000e-01 : f32
    %12 = vector.broadcast %cst_2 : f32 to vector<8x128xf32>
    %13 = vector.broadcast %cst_3 : f32 to vector<8x128xf32>
    %14 = arith.select %8, %12, %13 : vector<8x128xi1>, vector<8x128xf32>
    %cst_4 = arith.constant 0.000000e+00 : f32
    %15 = vector.broadcast %cst_4 : f32 to vector<8x32xf32>
    %c0_5 = arith.constant 0 : index
    %c0_6 = arith.constant 0 : index
    %16 = vector.load %arg2[%c0_5, %c0_6] : memref<16x128xbf16, #tpu.memory_space<vmem>>, vector<16x128xbf16>
    %c0_7 = arith.constant 0 : index
    %c0_8 = arith.constant 0 : index
    %17 = vector.load %arg3[%c0_7, %c0_8] : memref<32x128xbf16, #tpu.memory_space<vmem>>, vector<32x128xbf16>
    %c0_9 = arith.constant 0 : index
    %c0_10 = arith.constant 0 : index
    %18 = vector.load %arg4[%c0_9, %c0_10] : memref<1x128xf32, #tpu.memory_space<vmem>>, vector<1x128xf32>
    %c0_11 = arith.constant 0 : index
    %c0_12 = arith.constant 0 : index
    %19 = vector.load %arg0[%c0_11, %c0_12] : memref<64x16xbf16, #tpu.memory_space<vmem>>, vector<64x16xbf16>
    %cst_13 = arith.constant dense<0.000000e+00> : vector<64x128xf32>
    %20 = tpu.matmul %19, %16, %cst_13 {dimension_numbers = #tpu.dot_dimension_numbers<[1], [0], [0], [1], [0, 0, 1, 1], [], []>} : vector<64x16xbf16>, vector<16x128xbf16>, vector<64x128xf32> -> vector<64x128xf32>
    %21 = vector.broadcast %18 : vector<1x128xf32> to vector<64x128xf32>
    %22 = arith.addf %20, %21 : vector<64x128xf32>
    %c0_14 = arith.constant 0 : index
    %c0_15 = arith.constant 0 : index
    %23 = vector.load %arg11[%c0_14, %c0_15] : memref<64x128xf32, #tpu.memory_space<vmem>>, vector<64x128xf32>
    tpu.vector_store %arg11[%c0_14, %c0_15], %22 {strides = array<i32>} : memref<64x128xf32, #tpu.memory_space<vmem>>, vector<64x128xf32>,
    %cst_16 = arith.constant 0.000000e+00 : f32
    %24 = vector.broadcast %cst_16 : f32 to vector<8x32xf32>
    %cst_17 = arith.constant 0.000000e+00 : f32
    %25 = vector.broadcast %cst_17 : f32 to vector<8x32xf32>
    %c0_18 = arith.constant 0 : index
    %c0_19 = arith.constant 0 : index
    %26 = vector.load %arg11[%c0_18, %c0_19] : memref<64x128xf32, #tpu.memory_space<vmem>>, vector<8x128xf32>
    %27 = arith.truncf %24 : vector<8x32xf32> to vector<8x32xbf16>
    %cst_20 = arith.constant dense<0.000000e+00> : vector<8x128xf32>
    %28 = tpu.matmul %27, %17, %cst_20 {dimension_numbers = #tpu.dot_dimension_numbers<[1], [0], [0], [1], [0, 0, 1, 1], [], []>} : vector<8x32xbf16>, vector<32x128xbf16>, vector<8x128xf32> -> vector<8x128xf32>
    %29 = arith.addf %26, %28 : vector<8x128xf32>
    %30 = arith.mulf %29, %11 : vector<8x128xf32>
    %31 = math.tanh %30 : vector<8x128xf32>
    %32 = arith.mulf %31, %11 : vector<8x128xf32>
    %33 = arith.addf %32, %14 : vector<8x128xf32>
    %34 = vector.extract_strided_slice %33 {offsets = [0, 0], sizes = [8, 32], strides = [1, 1]} : vector<8x128xf32> to vector<8x32xf32>
    %35 = vector.extract_strided_slice %33 {offsets = [0, 32], sizes = [8, 32], strides = [1, 1]} : vector<8x128xf32> to vector<8x32xf32>
    %36 = vector.extract_strided_slice %33 {offsets = [0, 64], sizes = [8, 32], strides = [1, 1]} : vector<8x128xf32> to vector<8x32xf32>
    %37 = vector.extract_strided_slice %33 {offsets = [0, 96], sizes = [8, 32], strides = [1, 1]} : vector<8x128xf32> to vector<8x32xf32>
    %38 = arith.mulf %35, %25 : vector<8x32xf32>
    %39 = arith.mulf %34, %36 : vector<8x32xf32>
    %40 = arith.addf %38, %39 : vector<8x32xf32>
    %41 = math.tanh %40 : vector<8x32xf32>
    %42 = arith.mulf %37, %41 : vector<8x32xf32>
    %c0_21 = arith.constant 0 : index
    %c0_22 = arith.constant 0 : index
    %43 = vector.load %arg12[%c0_21, %c0_22] : memref<64x32xf32, #tpu.memory_space<vmem>>, vector<8x32xf32>
    tpu.vector_store %arg12[%c0_21, %c0_22], %42 {strides = array<i32>} : memref<64x32xf32, #tpu.memory_space<vmem>>, vector<8x32xf32>,
    %c8 = arith.constant 8 : index
    %c0_23 = arith.constant 0 : index
    %44 = vector.load %arg11[%c8, %c0_23] : memref<64x128xf32, #tpu.memory_space<vmem>>, vector<8x128xf32>
    %45 = arith.truncf %42 : vector<8x32xf32> to vector<8x32xbf16>
    %cst_24 = arith.constant dense<0.000000e+00> : vector<8x128xf32>
    %46 = tpu.matmul %45, %17, %cst_24 {dimension_numbers = #tpu.dot_dimension_numbers<[1], [0], [0], [1], [0, 0, 1, 1], [], []>} : vector<8x32xbf16>, vector<32x128xbf16>, vector<8x128xf32> -> vector<8x128xf32>
    %47 = arith.addf %44, %46 : vector<8x128xf32>
    %48 = arith.mulf %47, %11 : vector<8x128xf32>
    %49 = math.tanh %48 : vector<8x128xf32>
    %50 = arith.mulf %49, %11 : vector<8x128xf32>
    %51 = arith.addf %50, %14 : vector<8x128xf32>
    %52 = vector.extract_strided_slice %51 {offsets = [0, 0], sizes = [8, 32], strides = [1, 1]} : vector<8x128xf32> to vector<8x32xf32>
    %53 = vector.extract_strided_slice %51 {offsets = [0, 32], sizes = [8, 32], strides = [1, 1]} : vector<8x128xf32> to vector<8x32xf32>
    %54 = vector.extract_strided_slice %51 {offsets = [0, 64], sizes = [8, 32], strides = [1, 1]} : vector<8x128xf32> to vector<8x32xf32>
    %55 = vector.extract_strided_slice %51 {offsets = [0, 96], sizes = [8, 32], strides = [1, 1]} : vector<8x128xf32> to vector<8x32xf32>
    %56 = arith.mulf %53, %40 : vector<8x32xf32>
    %57 = arith.mulf %52, %54 : vector<8x32xf32>
    %58 = arith.addf %56, %57 : vector<8x32xf32>
    %59 = math.tanh %58 : vector<8x32xf32>
    %60 = arith.mulf %55, %59 : vector<8x32xf32>
    %c8_25 = arith.constant 8 : index
    %c0_26 = arith.constant 0 : index
    %61 = vector.load %arg12[%c8_25, %c0_26] : memref<64x32xf32, #tpu.memory_space<vmem>>, vector<8x32xf32>
    tpu.vector_store %arg12[%c8_25, %c0_26], %60 {strides = array<i32>} : memref<64x32xf32, #tpu.memory_space<vmem>>, vector<8x32xf32>,
    %c16 = arith.constant 16 : index
    %c0_27 = arith.constant 0 : index
    %62 = vector.load %arg11[%c16, %c0_27] : memref<64x128xf32, #tpu.memory_space<vmem>>, vector<8x128xf32>
    %63 = arith.truncf %60 : vector<8x32xf32> to vector<8x32xbf16>
    %cst_28 = arith.constant dense<0.000000e+00> : vector<8x128xf32>
    %64 = tpu.matmul %63, %17, %cst_28 {dimension_numbers = #tpu.dot_dimension_numbers<[1], [0], [0], [1], [0, 0, 1, 1], [], []>} : vector<8x32xbf16>, vector<32x128xbf16>, vector<8x128xf32> -> vector<8x128xf32>
    %65 = arith.addf %62, %64 : vector<8x128xf32>
    %66 = arith.mulf %65, %11 : vector<8x128xf32>
    %67 = math.tanh %66 : vector<8x128xf32>
    %68 = arith.mulf %67, %11 : vector<8x128xf32>
    %69 = arith.addf %68, %14 : vector<8x128xf32>
    %70 = vector.extract_strided_slice %69 {offsets = [0, 0], sizes = [8, 32], strides = [1, 1]} : vector<8x128xf32> to vector<8x32xf32>
    %71 = vector.extract_strided_slice %69 {offsets = [0, 32], sizes = [8, 32], strides = [1, 1]} : vector<8x128xf32> to vector<8x32xf32>
    %72 = vector.extract_strided_slice %69 {offsets = [0, 64], sizes = [8, 32], strides = [1, 1]} : vector<8x128xf32> to vector<8x32xf32>
    %73 = vector.extract_strided_slice %69 {offsets = [0, 96], sizes = [8, 32], strides = [1, 1]} : vector<8x128xf32> to vector<8x32xf32>
    %74 = arith.mulf %71, %58 : vector<8x32xf32>
    %75 = arith.mulf %70, %72 : vector<8x32xf32>
    %76 = arith.addf %74, %75 : vector<8x32xf32>
    %77 = math.tanh %76 : vector<8x32xf32>
    %78 = arith.mulf %73, %77 : vector<8x32xf32>
    %c16_29 = arith.constant 16 : index
    %c0_30 = arith.constant 0 : index
    %79 = vector.load %arg12[%c16_29, %c0_30] : memref<64x32xf32, #tpu.memory_space<vmem>>, vector<8x32xf32>
    tpu.vector_store %arg12[%c16_29, %c0_30], %78 {strides = array<i32>} : memref<64x32xf32, #tpu.memory_space<vmem>>, vector<8x32xf32>,
    %c24 = arith.constant 24 : index
    %c0_31 = arith.constant 0 : index
    %80 = vector.load %arg11[%c24, %c0_31] : memref<64x128xf32, #tpu.memory_space<vmem>>, vector<8x128xf32>
    %81 = arith.truncf %78 : vector<8x32xf32> to vector<8x32xbf16>
    %cst_32 = arith.constant dense<0.000000e+00> : vector<8x128xf32>
    %82 = tpu.matmul %81, %17, %cst_32 {dimension_numbers = #tpu.dot_dimension_numbers<[1], [0], [0], [1], [0, 0, 1, 1], [], []>} : vector<8x32xbf16>, vector<32x128xbf16>, vector<8x128xf32> -> vector<8x128xf32>
    %83 = arith.addf %80, %82 : vector<8x128xf32>
    %84 = arith.mulf %83, %11 : vector<8x128xf32>
    %85 = math.tanh %84 : vector<8x128xf32>
    %86 = arith.mulf %85, %11 : vector<8x128xf32>
    %87 = arith.addf %86, %14 : vector<8x128xf32>
    %88 = vector.extract_strided_slice %87 {offsets = [0, 0], sizes = [8, 32], strides = [1, 1]} : vector<8x128xf32> to vector<8x32xf32>
    %89 = vector.extract_strided_slice %87 {offsets = [0, 32], sizes = [8, 32], strides = [1, 1]} : vector<8x128xf32> to vector<8x32xf32>
    %90 = vector.extract_strided_slice %87 {offsets = [0, 64], sizes = [8, 32], strides = [1, 1]} : vector<8x128xf32> to vector<8x32xf32>
    %91 = vector.extract_strided_slice %87 {offsets = [0, 96], sizes = [8, 32], strides = [1, 1]} : vector<8x128xf32> to vector<8x32xf32>
    %92 = arith.mulf %89, %76 : vector<8x32xf32>
    %93 = arith.mulf %88, %90 : vector<8x32xf32>
    %94 = arith.addf %92, %93 : vector<8x32xf32>
    %95 = math.tanh %94 : vector<8x32xf32>
    %96 = arith.mulf %91, %95 : vector<8x32xf32>
    %c24_33 = arith.constant 24 : index
    %c0_34 = arith.constant 0 : index
    %97 = vector.load %arg12[%c24_33, %c0_34] : memref<64x32xf32, #tpu.memory_space<vmem>>, vector<8x32xf32>
    tpu.vector_store %arg12[%c24_33, %c0_34], %96 {strides = array<i32>} : memref<64x32xf32, #tpu.memory_space<vmem>>, vector<8x32xf32>,
    %c32 = arith.constant 32 : index
    %c0_35 = arith.constant 0 : index
    %98 = vector.load %arg11[%c32, %c0_35] : memref<64x128xf32, #tpu.memory_space<vmem>>, vector<8x128xf32>
    %99 = arith.truncf %96 : vector<8x32xf32> to vector<8x32xbf16>
    %cst_36 = arith.constant dense<0.000000e+00> : vector<8x128xf32>
    %100 = tpu.matmul %99, %17, %cst_36 {dimension_numbers = #tpu.dot_dimension_numbers<[1], [0], [0], [1], [0, 0, 1, 1], [], []>} : vector<8x32xbf16>, vector<32x128xbf16>, vector<8x128xf32> -> vector<8x128xf32>
    %101 = arith.addf %98, %100 : vector<8x128xf32>
    %102 = arith.mulf %101, %11 : vector<8x128xf32>
    %103 = math.tanh %102 : vector<8x128xf32>
    %104 = arith.mulf %103, %11 : vector<8x128xf32>
    %105 = arith.addf %104, %14 : vector<8x128xf32>
    %106 = vector.extract_strided_slice %105 {offsets = [0, 0], sizes = [8, 32], strides = [1, 1]} : vector<8x128xf32> to vector<8x32xf32>
    %107 = vector.extract_strided_slice %105 {offsets = [0, 32], sizes = [8, 32], strides = [1, 1]} : vector<8x128xf32> to vector<8x32xf32>
    %108 = vector.extract_strided_slice %105 {offsets = [0, 64], sizes = [8, 32], strides = [1, 1]} : vector<8x128xf32> to vector<8x32xf32>
    %109 = vector.extract_strided_slice %105 {offsets = [0, 96], sizes = [8, 32], strides = [1, 1]} : vector<8x128xf32> to vector<8x32xf32>
    %110 = arith.mulf %107, %94 : vector<8x32xf32>
    %111 = arith.mulf %106, %108 : vector<8x32xf32>
    %112 = arith.addf %110, %111 : vector<8x32xf32>
    %113 = math.tanh %112 : vector<8x32xf32>
    %114 = arith.mulf %109, %113 : vector<8x32xf32>
    %c32_37 = arith.constant 32 : index
    %c0_38 = arith.constant 0 : index
    %115 = vector.load %arg12[%c32_37, %c0_38] : memref<64x32xf32, #tpu.memory_space<vmem>>, vector<8x32xf32>
    tpu.vector_store %arg12[%c32_37, %c0_38], %114 {strides = array<i32>} : memref<64x32xf32, #tpu.memory_space<vmem>>, vector<8x32xf32>,
    %c40 = arith.constant 40 : index
    %c0_39 = arith.constant 0 : index
    %116 = vector.load %arg11[%c40, %c0_39] : memref<64x128xf32, #tpu.memory_space<vmem>>, vector<8x128xf32>
    %117 = arith.truncf %114 : vector<8x32xf32> to vector<8x32xbf16>
    %cst_40 = arith.constant dense<0.000000e+00> : vector<8x128xf32>
    %118 = tpu.matmul %117, %17, %cst_40 {dimension_numbers = #tpu.dot_dimension_numbers<[1], [0], [0], [1], [0, 0, 1, 1], [], []>} : vector<8x32xbf16>, vector<32x128xbf16>, vector<8x128xf32> -> vector<8x128xf32>
    %119 = arith.addf %116, %118 : vector<8x128xf32>
    %120 = arith.mulf %119, %11 : vector<8x128xf32>
    %121 = math.tanh %120 : vector<8x128xf32>
    %122 = arith.mulf %121, %11 : vector<8x128xf32>
    %123 = arith.addf %122, %14 : vector<8x128xf32>
    %124 = vector.extract_strided_slice %123 {offsets = [0, 0], sizes = [8, 32], strides = [1, 1]} : vector<8x128xf32> to vector<8x32xf32>
    %125 = vector.extract_strided_slice %123 {offsets = [0, 32], sizes = [8, 32], strides = [1, 1]} : vector<8x128xf32> to vector<8x32xf32>
    %126 = vector.extract_strided_slice %123 {offsets = [0, 64], sizes = [8, 32], strides = [1, 1]} : vector<8x128xf32> to vector<8x32xf32>
    %127 = vector.extract_strided_slice %123 {offsets = [0, 96], sizes = [8, 32], strides = [1, 1]} : vector<8x128xf32> to vector<8x32xf32>
    %128 = arith.mulf %125, %112 : vector<8x32xf32>
    %129 = arith.mulf %124, %126 : vector<8x32xf32>
    %130 = arith.addf %128, %129 : vector<8x32xf32>
    %131 = math.tanh %130 : vector<8x32xf32>
    %132 = arith.mulf %127, %131 : vector<8x32xf32>
    %c40_41 = arith.constant 40 : index
    %c0_42 = arith.constant 0 : index
    %133 = vector.load %arg12[%c40_41, %c0_42] : memref<64x32xf32, #tpu.memory_space<vmem>>, vector<8x32xf32>
    tpu.vector_store %arg12[%c40_41, %c0_42], %132 {strides = array<i32>} : memref<64x32xf32, #tpu.memory_space<vmem>>, vector<8x32xf32>,
    %c48 = arith.constant 48 : index
    %c0_43 = arith.constant 0 : index
    %134 = vector.load %arg11[%c48, %c0_43] : memref<64x128xf32, #tpu.memory_space<vmem>>, vector<8x128xf32>
    %135 = arith.truncf %132 : vector<8x32xf32> to vector<8x32xbf16>
    %cst_44 = arith.constant dense<0.000000e+00> : vector<8x128xf32>
    %136 = tpu.matmul %135, %17, %cst_44 {dimension_numbers = #tpu.dot_dimension_numbers<[1], [0], [0], [1], [0, 0, 1, 1], [], []>} : vector<8x32xbf16>, vector<32x128xbf16>, vector<8x128xf32> -> vector<8x128xf32>
    %137 = arith.addf %134, %136 : vector<8x128xf32>
    %138 = arith.mulf %137, %11 : vector<8x128xf32>
    %139 = math.tanh %138 : vector<8x128xf32>
    %140 = arith.mulf %139, %11 : vector<8x128xf32>
    %141 = arith.addf %140, %14 : vector<8x128xf32>
    %142 = vector.extract_strided_slice %141 {offsets = [0, 0], sizes = [8, 32], strides = [1, 1]} : vector<8x128xf32> to vector<8x32xf32>
    %143 = vector.extract_strided_slice %141 {offsets = [0, 32], sizes = [8, 32], strides = [1, 1]} : vector<8x128xf32> to vector<8x32xf32>
    %144 = vector.extract_strided_slice %141 {offsets = [0, 64], sizes = [8, 32], strides = [1, 1]} : vector<8x128xf32> to vector<8x32xf32>
    %145 = vector.extract_strided_slice %141 {offsets = [0, 96], sizes = [8, 32], strides = [1, 1]} : vector<8x128xf32> to vector<8x32xf32>
    %146 = arith.mulf %143, %130 : vector<8x32xf32>
    %147 = arith.mulf %142, %144 : vector<8x32xf32>
    %148 = arith.addf %146, %147 : vector<8x32xf32>
    %149 = math.tanh %148 : vector<8x32xf32>
    %150 = arith.mulf %145, %149 : vector<8x32xf32>
    %c48_45 = arith.constant 48 : index
    %c0_46 = arith.constant 0 : index
    %151 = vector.load %arg12[%c48_45, %c0_46] : memref<64x32xf32, #tpu.memory_space<vmem>>, vector<8x32xf32>
    tpu.vector_store %arg12[%c48_45, %c0_46], %150 {strides = array<i32>} : memref<64x32xf32, #tpu.memory_space<vmem>>, vector<8x32xf32>,
    %c56 = arith.constant 56 : index
    %c0_47 = arith.constant 0 : index
    %152 = vector.load %arg11[%c56, %c0_47] : memref<64x128xf32, #tpu.memory_space<vmem>>, vector<8x128xf32>
    %153 = arith.truncf %150 : vector<8x32xf32> to vector<8x32xbf16>
    %cst_48 = arith.constant dense<0.000000e+00> : vector<8x128xf32>
    %154 = tpu.matmul %153, %17, %cst_48 {dimension_numbers = #tpu.dot_dimension_numbers<[1], [0], [0], [1], [0, 0, 1, 1], [], []>} : vector<8x32xbf16>, vector<32x128xbf16>, vector<8x128xf32> -> vector<8x128xf32>
    %155 = arith.addf %152, %154 : vector<8x128xf32>
    %156 = arith.mulf %155, %11 : vector<8x128xf32>
    %157 = math.tanh %156 : vector<8x128xf32>
    %158 = arith.mulf %157, %11 : vector<8x128xf32>
    %159 = arith.addf %158, %14 : vector<8x128xf32>
    %160 = vector.extract_strided_slice %159 {offsets = [0, 0], sizes = [8, 32], strides = [1, 1]} : vector<8x128xf32> to vector<8x32xf32>
    %161 = vector.extract_strided_slice %159 {offsets = [0, 32], sizes = [8, 32], strides = [1, 1]} : vector<8x128xf32> to vector<8x32xf32>
    %162 = vector.extract_strided_slice %159 {offsets = [0, 64], sizes = [8, 32], strides = [1, 1]} : vector<8x128xf32> to vector<8x32xf32>
    %163 = vector.extract_strided_slice %159 {offsets = [0, 96], sizes = [8, 32], strides = [1, 1]} : vector<8x128xf32> to vector<8x32xf32>
    %164 = arith.mulf %161, %148 : vector<8x32xf32>
    %165 = arith.mulf %160, %162 : vector<8x32xf32>
    %166 = arith.addf %164, %165 : vector<8x32xf32>
    %167 = math.tanh %166 : vector<8x32xf32>
    %168 = arith.mulf %163, %167 : vector<8x32xf32>
    %c56_49 = arith.constant 56 : index
    %c0_50 = arith.constant 0 : index
    %169 = vector.load %arg12[%c56_49, %c0_50] : memref<64x32xf32, #tpu.memory_space<vmem>>, vector<8x32xf32>
    tpu.vector_store %arg12[%c56_49, %c0_50], %168 {strides = array<i32>} : memref<64x32xf32, #tpu.memory_space<vmem>>, vector<8x32xf32>,
    %c0_51 = arith.constant 0 : index
    %c0_52 = arith.constant 0 : index
    %170 = vector.load %arg5[%c0_51, %c0_52] : memref<32x128xbf16, #tpu.memory_space<vmem>>, vector<32x128xbf16>
    %c0_53 = arith.constant 0 : index
    %c0_54 = arith.constant 0 : index
    %171 = vector.load %arg6[%c0_53, %c0_54] : memref<32x128xbf16, #tpu.memory_space<vmem>>, vector<32x128xbf16>
    %c0_55 = arith.constant 0 : index
    %c0_56 = arith.constant 0 : index
    %172 = vector.load %arg7[%c0_55, %c0_56] : memref<1x128xf32, #tpu.memory_space<vmem>>, vector<1x128xf32>
    %c0_57 = arith.constant 0 : index
    %c0_58 = arith.constant 0 : index
    %173 = vector.load %arg12[%c0_57, %c0_58] : memref<64x32xf32, #tpu.memory_space<vmem>>, vector<64x32xf32>
    %174 = arith.truncf %173 : vector<64x32xf32> to vector<64x32xbf16>
    %cst_59 = arith.constant dense<0.000000e+00> : vector<64x128xf32>
    %175 = tpu.matmul %174, %170, %cst_59 {dimension_numbers = #tpu.dot_dimension_numbers<[1], [0], [0], [1], [0, 0, 1, 1], [], []>} : vector<64x32xbf16>, vector<32x128xbf16>, vector<64x128xf32> -> vector<64x128xf32>
    %176 = vector.broadcast %172 : vector<1x128xf32> to vector<64x128xf32>
    %177 = arith.addf %175, %176 : vector<64x128xf32>
    %c0_60 = arith.constant 0 : index
    %c0_61 = arith.constant 0 : index
    %178 = vector.load %arg11[%c0_60, %c0_61] : memref<64x128xf32, #tpu.memory_space<vmem>>, vector<64x128xf32>
    tpu.vector_store %arg11[%c0_60, %c0_61], %177 {strides = array<i32>} : memref<64x128xf32, #tpu.memory_space<vmem>>, vector<64x128xf32>,
    %cst_62 = arith.constant 0.000000e+00 : f32
    %179 = vector.broadcast %cst_62 : f32 to vector<8x32xf32>
    %cst_63 = arith.constant 0.000000e+00 : f32
    %180 = vector.broadcast %cst_63 : f32 to vector<8x32xf32>
    %c0_64 = arith.constant 0 : index
    %c0_65 = arith.constant 0 : index
    %181 = vector.load %arg11[%c0_64, %c0_65] : memref<64x128xf32, #tpu.memory_space<vmem>>, vector<8x128xf32>
    %182 = arith.truncf %179 : vector<8x32xf32> to vector<8x32xbf16>
    %cst_66 = arith.constant dense<0.000000e+00> : vector<8x128xf32>
    %183 = tpu.matmul %182, %171, %cst_66 {dimension_numbers = #tpu.dot_dimension_numbers<[1], [0], [0], [1], [0, 0, 1, 1], [], []>} : vector<8x32xbf16>, vector<32x128xbf16>, vector<8x128xf32> -> vector<8x128xf32>
    %184 = arith.addf %181, %183 : vector<8x128xf32>
    %185 = arith.mulf %184, %11 : vector<8x128xf32>
    %186 = math.tanh %185 : vector<8x128xf32>
    %187 = arith.mulf %186, %11 : vector<8x128xf32>
    %188 = arith.addf %187, %14 : vector<8x128xf32>
    %189 = vector.extract_strided_slice %188 {offsets = [0, 0], sizes = [8, 32], strides = [1, 1]} : vector<8x128xf32> to vector<8x32xf32>
    %190 = vector.extract_strided_slice %188 {offsets = [0, 32], sizes = [8, 32], strides = [1, 1]} : vector<8x128xf32> to vector<8x32xf32>
    %191 = vector.extract_strided_slice %188 {offsets = [0, 64], sizes = [8, 32], strides = [1, 1]} : vector<8x128xf32> to vector<8x32xf32>
    %192 = vector.extract_strided_slice %188 {offsets = [0, 96], sizes = [8, 32], strides = [1, 1]} : vector<8x128xf32> to vector<8x32xf32>
    %193 = arith.mulf %190, %180 : vector<8x32xf32>
    %194 = arith.mulf %189, %191 : vector<8x32xf32>
    %195 = arith.addf %193, %194 : vector<8x32xf32>
    %196 = math.tanh %195 : vector<8x32xf32>
    %197 = arith.mulf %192, %196 : vector<8x32xf32>
    %c0_i32 = arith.constant 0 : i32
    %198 = vector.broadcast %c0_i32 : i32 to vector<8x1xi32>
    %199 = arith.cmpi eq, %2, %198 : vector<8x1xi32>
    %200 = vector.shape_cast %199 : vector<8x1xi1> to vector<8x1xi1>
    %201 = vector.broadcast %200 : vector<8x1xi1> to vector<8x32xi1>
    %202 = arith.select %201, %197, %15 : vector<8x32xi1>, vector<8x32xf32>
    %c8_67 = arith.constant 8 : index
    %c0_68 = arith.constant 0 : index
    %203 = vector.load %arg11[%c8_67, %c0_68] : memref<64x128xf32, #tpu.memory_space<vmem>>, vector<8x128xf32>
    %204 = arith.truncf %197 : vector<8x32xf32> to vector<8x32xbf16>
    %cst_69 = arith.constant dense<0.000000e+00> : vector<8x128xf32>
    %205 = tpu.matmul %204, %171, %cst_69 {dimension_numbers = #tpu.dot_dimension_numbers<[1], [0], [0], [1], [0, 0, 1, 1], [], []>} : vector<8x32xbf16>, vector<32x128xbf16>, vector<8x128xf32> -> vector<8x128xf32>
    %206 = arith.addf %203, %205 : vector<8x128xf32>
    %207 = arith.mulf %206, %11 : vector<8x128xf32>
    %208 = math.tanh %207 : vector<8x128xf32>
    %209 = arith.mulf %208, %11 : vector<8x128xf32>
    %210 = arith.addf %209, %14 : vector<8x128xf32>
    %211 = vector.extract_strided_slice %210 {offsets = [0, 0], sizes = [8, 32], strides = [1, 1]} : vector<8x128xf32> to vector<8x32xf32>
    %212 = vector.extract_strided_slice %210 {offsets = [0, 32], sizes = [8, 32], strides = [1, 1]} : vector<8x128xf32> to vector<8x32xf32>
    %213 = vector.extract_strided_slice %210 {offsets = [0, 64], sizes = [8, 32], strides = [1, 1]} : vector<8x128xf32> to vector<8x32xf32>
    %214 = vector.extract_strided_slice %210 {offsets = [0, 96], sizes = [8, 32], strides = [1, 1]} : vector<8x128xf32> to vector<8x32xf32>
    %215 = arith.mulf %212, %195 : vector<8x32xf32>
    %216 = arith.mulf %211, %213 : vector<8x32xf32>
    %217 = arith.addf %215, %216 : vector<8x32xf32>
    %218 = math.tanh %217 : vector<8x32xf32>
    %219 = arith.mulf %214, %218 : vector<8x32xf32>
    %c1_i32_70 = arith.constant 1 : i32
    %220 = vector.broadcast %c1_i32_70 : i32 to vector<8x1xi32>
    %221 = arith.cmpi eq, %2, %220 : vector<8x1xi32>
    %222 = vector.shape_cast %221 : vector<8x1xi1> to vector<8x1xi1>
    %223 = vector.broadcast %222 : vector<8x1xi1> to vector<8x32xi1>
    %224 = arith.select %223, %219, %202 : vector<8x32xi1>, vector<8x32xf32>
    %c16_71 = arith.constant 16 : index
    %c0_72 = arith.constant 0 : index
    %225 = vector.load %arg11[%c16_71, %c0_72] : memref<64x128xf32, #tpu.memory_space<vmem>>, vector<8x128xf32>
    %226 = arith.truncf %219 : vector<8x32xf32> to vector<8x32xbf16>
    %cst_73 = arith.constant dense<0.000000e+00> : vector<8x128xf32>
    %227 = tpu.matmul %226, %171, %cst_73 {dimension_numbers = #tpu.dot_dimension_numbers<[1], [0], [0], [1], [0, 0, 1, 1], [], []>} : vector<8x32xbf16>, vector<32x128xbf16>, vector<8x128xf32> -> vector<8x128xf32>
    %228 = arith.addf %225, %227 : vector<8x128xf32>
    %229 = arith.mulf %228, %11 : vector<8x128xf32>
    %230 = math.tanh %229 : vector<8x128xf32>
    %231 = arith.mulf %230, %11 : vector<8x128xf32>
    %232 = arith.addf %231, %14 : vector<8x128xf32>
    %233 = vector.extract_strided_slice %232 {offsets = [0, 0], sizes = [8, 32], strides = [1, 1]} : vector<8x128xf32> to vector<8x32xf32>
    %234 = vector.extract_strided_slice %232 {offsets = [0, 32], sizes = [8, 32], strides = [1, 1]} : vector<8x128xf32> to vector<8x32xf32>
    %235 = vector.extract_strided_slice %232 {offsets = [0, 64], sizes = [8, 32], strides = [1, 1]} : vector<8x128xf32> to vector<8x32xf32>
    %236 = vector.extract_strided_slice %232 {offsets = [0, 96], sizes = [8, 32], strides = [1, 1]} : vector<8x128xf32> to vector<8x32xf32>
    %237 = arith.mulf %234, %217 : vector<8x32xf32>
    %238 = arith.mulf %233, %235 : vector<8x32xf32>
    %239 = arith.addf %237, %238 : vector<8x32xf32>
    %240 = math.tanh %239 : vector<8x32xf32>
    %241 = arith.mulf %236, %240 : vector<8x32xf32>
    %c2_i32 = arith.constant 2 : i32
    %242 = vector.broadcast %c2_i32 : i32 to vector<8x1xi32>
    %243 = arith.cmpi eq, %2, %242 : vector<8x1xi32>
    %244 = vector.shape_cast %243 : vector<8x1xi1> to vector<8x1xi1>
    %245 = vector.broadcast %244 : vector<8x1xi1> to vector<8x32xi1>
    %246 = arith.select %245, %241, %224 : vector<8x32xi1>, vector<8x32xf32>
    %c24_74 = arith.constant 24 : index
    %c0_75 = arith.constant 0 : index
    %247 = vector.load %arg11[%c24_74, %c0_75] : memref<64x128xf32, #tpu.memory_space<vmem>>, vector<8x128xf32>
    %248 = arith.truncf %241 : vector<8x32xf32> to vector<8x32xbf16>
    %cst_76 = arith.constant dense<0.000000e+00> : vector<8x128xf32>
    %249 = tpu.matmul %248, %171, %cst_76 {dimension_numbers = #tpu.dot_dimension_numbers<[1], [0], [0], [1], [0, 0, 1, 1], [], []>} : vector<8x32xbf16>, vector<32x128xbf16>, vector<8x128xf32> -> vector<8x128xf32>
    %250 = arith.addf %247, %249 : vector<8x128xf32>
    %251 = arith.mulf %250, %11 : vector<8x128xf32>
    %252 = math.tanh %251 : vector<8x128xf32>
    %253 = arith.mulf %252, %11 : vector<8x128xf32>
    %254 = arith.addf %253, %14 : vector<8x128xf32>
    %255 = vector.extract_strided_slice %254 {offsets = [0, 0], sizes = [8, 32], strides = [1, 1]} : vector<8x128xf32> to vector<8x32xf32>
    %256 = vector.extract_strided_slice %254 {offsets = [0, 32], sizes = [8, 32], strides = [1, 1]} : vector<8x128xf32> to vector<8x32xf32>
    %257 = vector.extract_strided_slice %254 {offsets = [0, 64], sizes = [8, 32], strides = [1, 1]} : vector<8x128xf32> to vector<8x32xf32>
    %258 = vector.extract_strided_slice %254 {offsets = [0, 96], sizes = [8, 32], strides = [1, 1]} : vector<8x128xf32> to vector<8x32xf32>
    %259 = arith.mulf %256, %239 : vector<8x32xf32>
    %260 = arith.mulf %255, %257 : vector<8x32xf32>
    %261 = arith.addf %259, %260 : vector<8x32xf32>
    %262 = math.tanh %261 : vector<8x32xf32>
    %263 = arith.mulf %258, %262 : vector<8x32xf32>
    %c3_i32 = arith.constant 3 : i32
    %264 = vector.broadcast %c3_i32 : i32 to vector<8x1xi32>
    %265 = arith.cmpi eq, %2, %264 : vector<8x1xi32>
    %266 = vector.shape_cast %265 : vector<8x1xi1> to vector<8x1xi1>
    %267 = vector.broadcast %266 : vector<8x1xi1> to vector<8x32xi1>
    %268 = arith.select %267, %263, %246 : vector<8x32xi1>, vector<8x32xf32>
    %c32_77 = arith.constant 32 : index
    %c0_78 = arith.constant 0 : index
    %269 = vector.load %arg11[%c32_77, %c0_78] : memref<64x128xf32, #tpu.memory_space<vmem>>, vector<8x128xf32>
    %270 = arith.truncf %263 : vector<8x32xf32> to vector<8x32xbf16>
    %cst_79 = arith.constant dense<0.000000e+00> : vector<8x128xf32>
    %271 = tpu.matmul %270, %171, %cst_79 {dimension_numbers = #tpu.dot_dimension_numbers<[1], [0], [0], [1], [0, 0, 1, 1], [], []>} : vector<8x32xbf16>, vector<32x128xbf16>, vector<8x128xf32> -> vector<8x128xf32>
    %272 = arith.addf %269, %271 : vector<8x128xf32>
    %273 = arith.mulf %272, %11 : vector<8x128xf32>
    %274 = math.tanh %273 : vector<8x128xf32>
    %275 = arith.mulf %274, %11 : vector<8x128xf32>
    %276 = arith.addf %275, %14 : vector<8x128xf32>
    %277 = vector.extract_strided_slice %276 {offsets = [0, 0], sizes = [8, 32], strides = [1, 1]} : vector<8x128xf32> to vector<8x32xf32>
    %278 = vector.extract_strided_slice %276 {offsets = [0, 32], sizes = [8, 32], strides = [1, 1]} : vector<8x128xf32> to vector<8x32xf32>
    %279 = vector.extract_strided_slice %276 {offsets = [0, 64], sizes = [8, 32], strides = [1, 1]} : vector<8x128xf32> to vector<8x32xf32>
    %280 = vector.extract_strided_slice %276 {offsets = [0, 96], sizes = [8, 32], strides = [1, 1]} : vector<8x128xf32> to vector<8x32xf32>
    %281 = arith.mulf %278, %261 : vector<8x32xf32>
    %282 = arith.mulf %277, %279 : vector<8x32xf32>
    %283 = arith.addf %281, %282 : vector<8x32xf32>
    %284 = math.tanh %283 : vector<8x32xf32>
    %285 = arith.mulf %280, %284 : vector<8x32xf32>
    %c4_i32 = arith.constant 4 : i32
    %286 = vector.broadcast %c4_i32 : i32 to vector<8x1xi32>
    %287 = arith.cmpi eq, %2, %286 : vector<8x1xi32>
    %288 = vector.shape_cast %287 : vector<8x1xi1> to vector<8x1xi1>
    %289 = vector.broadcast %288 : vector<8x1xi1> to vector<8x32xi1>
    %290 = arith.select %289, %285, %268 : vector<8x32xi1>, vector<8x32xf32>
    %c40_80 = arith.constant 40 : index
    %c0_81 = arith.constant 0 : index
    %291 = vector.load %arg11[%c40_80, %c0_81] : memref<64x128xf32, #tpu.memory_space<vmem>>, vector<8x128xf32>
    %292 = arith.truncf %285 : vector<8x32xf32> to vector<8x32xbf16>
    %cst_82 = arith.constant dense<0.000000e+00> : vector<8x128xf32>
    %293 = tpu.matmul %292, %171, %cst_82 {dimension_numbers = #tpu.dot_dimension_numbers<[1], [0], [0], [1], [0, 0, 1, 1], [], []>} : vector<8x32xbf16>, vector<32x128xbf16>, vector<8x128xf32> -> vector<8x128xf32>
    %294 = arith.addf %291, %293 : vector<8x128xf32>
    %295 = arith.mulf %294, %11 : vector<8x128xf32>
    %296 = math.tanh %295 : vector<8x128xf32>
    %297 = arith.mulf %296, %11 : vector<8x128xf32>
    %298 = arith.addf %297, %14 : vector<8x128xf32>
    %299 = vector.extract_strided_slice %298 {offsets = [0, 0], sizes = [8, 32], strides = [1, 1]} : vector<8x128xf32> to vector<8x32xf32>
    %300 = vector.extract_strided_slice %298 {offsets = [0, 32], sizes = [8, 32], strides = [1, 1]} : vector<8x128xf32> to vector<8x32xf32>
    %301 = vector.extract_strided_slice %298 {offsets = [0, 64], sizes = [8, 32], strides = [1, 1]} : vector<8x128xf32> to vector<8x32xf32>
    %302 = vector.extract_strided_slice %298 {offsets = [0, 96], sizes = [8, 32], strides = [1, 1]} : vector<8x128xf32> to vector<8x32xf32>
    %303 = arith.mulf %300, %283 : vector<8x32xf32>
    %304 = arith.mulf %299, %301 : vector<8x32xf32>
    %305 = arith.addf %303, %304 : vector<8x32xf32>
    %306 = math.tanh %305 : vector<8x32xf32>
    %307 = arith.mulf %302, %306 : vector<8x32xf32>
    %c5_i32 = arith.constant 5 : i32
    %308 = vector.broadcast %c5_i32 : i32 to vector<8x1xi32>
    %309 = arith.cmpi eq, %2, %308 : vector<8x1xi32>
    %310 = vector.shape_cast %309 : vector<8x1xi1> to vector<8x1xi1>
    %311 = vector.broadcast %310 : vector<8x1xi1> to vector<8x32xi1>
    %312 = arith.select %311, %307, %290 : vector<8x32xi1>, vector<8x32xf32>
    %c48_83 = arith.constant 48 : index
    %c0_84 = arith.constant 0 : index
    %313 = vector.load %arg11[%c48_83, %c0_84] : memref<64x128xf32, #tpu.memory_space<vmem>>, vector<8x128xf32>
    %314 = arith.truncf %307 : vector<8x32xf32> to vector<8x32xbf16>
    %cst_85 = arith.constant dense<0.000000e+00> : vector<8x128xf32>
    %315 = tpu.matmul %314, %171, %cst_85 {dimension_numbers = #tpu.dot_dimension_numbers<[1], [0], [0], [1], [0, 0, 1, 1], [], []>} : vector<8x32xbf16>, vector<32x128xbf16>, vector<8x128xf32> -> vector<8x128xf32>
    %316 = arith.addf %313, %315 : vector<8x128xf32>
    %317 = arith.mulf %316, %11 : vector<8x128xf32>
    %318 = math.tanh %317 : vector<8x128xf32>
    %319 = arith.mulf %318, %11 : vector<8x128xf32>
    %320 = arith.addf %319, %14 : vector<8x128xf32>
    %321 = vector.extract_strided_slice %320 {offsets = [0, 0], sizes = [8, 32], strides = [1, 1]} : vector<8x128xf32> to vector<8x32xf32>
    %322 = vector.extract_strided_slice %320 {offsets = [0, 32], sizes = [8, 32], strides = [1, 1]} : vector<8x128xf32> to vector<8x32xf32>
    %323 = vector.extract_strided_slice %320 {offsets = [0, 64], sizes = [8, 32], strides = [1, 1]} : vector<8x128xf32> to vector<8x32xf32>
    %324 = vector.extract_strided_slice %320 {offsets = [0, 96], sizes = [8, 32], strides = [1, 1]} : vector<8x128xf32> to vector<8x32xf32>
    %325 = arith.mulf %322, %305 : vector<8x32xf32>
    %326 = arith.mulf %321, %323 : vector<8x32xf32>
    %327 = arith.addf %325, %326 : vector<8x32xf32>
    %328 = math.tanh %327 : vector<8x32xf32>
    %329 = arith.mulf %324, %328 : vector<8x32xf32>
    %c6_i32 = arith.constant 6 : i32
    %330 = vector.broadcast %c6_i32 : i32 to vector<8x1xi32>
    %331 = arith.cmpi eq, %2, %330 : vector<8x1xi32>
    %332 = vector.shape_cast %331 : vector<8x1xi1> to vector<8x1xi1>
    %333 = vector.broadcast %332 : vector<8x1xi1> to vector<8x32xi1>
    %334 = arith.select %333, %329, %312 : vector<8x32xi1>, vector<8x32xf32>
    %c56_86 = arith.constant 56 : index
    %c0_87 = arith.constant 0 : index
    %335 = vector.load %arg11[%c56_86, %c0_87] : memref<64x128xf32, #tpu.memory_space<vmem>>, vector<8x128xf32>
    %336 = arith.truncf %329 : vector<8x32xf32> to vector<8x32xbf16>
    %cst_88 = arith.constant dense<0.000000e+00> : vector<8x128xf32>
    %337 = tpu.matmul %336, %171, %cst_88 {dimension_numbers = #tpu.dot_dimension_numbers<[1], [0], [0], [1], [0, 0, 1, 1], [], []>} : vector<8x32xbf16>, vector<32x128xbf16>, vector<8x128xf32> -> vector<8x128xf32>
    %338 = arith.addf %335, %337 : vector<8x128xf32>
    %339 = arith.mulf %338, %11 : vector<8x128xf32>
    %340 = math.tanh %339 : vector<8x128xf32>
    %341 = arith.mulf %340, %11 : vector<8x128xf32>
    %342 = arith.addf %341, %14 : vector<8x128xf32>
    %343 = vector.extract_strided_slice %342 {offsets = [0, 0], sizes = [8, 32], strides = [1, 1]} : vector<8x128xf32> to vector<8x32xf32>
    %344 = vector.extract_strided_slice %342 {offsets = [0, 32], sizes = [8, 32], strides = [1, 1]} : vector<8x128xf32> to vector<8x32xf32>
    %345 = vector.extract_strided_slice %342 {offsets = [0, 64], sizes = [8, 32], strides = [1, 1]} : vector<8x128xf32> to vector<8x32xf32>
    %346 = vector.extract_strided_slice %342 {offsets = [0, 96], sizes = [8, 32], strides = [1, 1]} : vector<8x128xf32> to vector<8x32xf32>
    %347 = arith.mulf %344, %327 : vector<8x32xf32>
    %348 = arith.mulf %343, %345 : vector<8x32xf32>
    %349 = arith.addf %347, %348 : vector<8x32xf32>
    %350 = math.tanh %349 : vector<8x32xf32>
    %351 = arith.mulf %346, %350 : vector<8x32xf32>
    %c7_i32 = arith.constant 7 : i32
    %352 = vector.broadcast %c7_i32 : i32 to vector<8x1xi32>
    %353 = arith.cmpi eq, %2, %352 : vector<8x1xi32>
    %354 = vector.shape_cast %353 : vector<8x1xi1> to vector<8x1xi1>
    %355 = vector.broadcast %354 : vector<8x1xi1> to vector<8x32xi1>
    %356 = arith.select %355, %351, %334 : vector<8x32xi1>, vector<8x32xf32>
    %c0_89 = arith.constant 0 : index
    %c0_90 = arith.constant 0 : index
    %357 = vector.load %arg8[%c0_89, %c0_90] : memref<32x8xf32, #tpu.memory_space<vmem>>, vector<32x8xf32>
    %cst_91 = arith.constant dense<0.000000e+00> : vector<8x8xf32>
    %358 = tpu.matmul %356, %357, %cst_91 {dimension_numbers = #tpu.dot_dimension_numbers<[1], [0], [0], [1], [0, 0, 1, 1], [], []>} : vector<8x32xf32>, vector<32x8xf32>, vector<8x8xf32> -> vector<8x8xf32>
    %c0_92 = arith.constant 0 : index
    %c0_93 = arith.constant 0 : index
    %359 = vector.load %arg9[%c0_92, %c0_93] : memref<1x8xf32, #tpu.memory_space<vmem>>, vector<1x8xf32>
    %360 = vector.broadcast %359 : vector<1x8xf32> to vector<8x8xf32>
    %361 = arith.addf %358, %360 : vector<8x8xf32>
    %c0_94 = arith.constant 0 : index
    %c0_95 = arith.constant 0 : index
    %362 = vector.load %arg10[%c0_94, %c0_95] : memref<8x8xf32, #tpu.memory_space<vmem>>, vector<8x8xf32>
    tpu.vector_store %arg10[%c0_94, %c0_95], %361 {strides = array<i32>} : memref<8x8xf32, #tpu.memory_space<vmem>>, vector<8x8xf32>,
    return
  }
}

</mosaic_0001>

<llo_original>
// kernel: tpu_custom_call.1
$region0: #{tpu_custom_call.1}
  #allocation0 [shape = 'u32[]', space=smem, size = 0x4, offset = 0x4, fixed_abs, tag = 'smem constant byte address 0x4 - core index']
  #allocation1 [shape = 'u32[144,128]{1,0:T(1,128)}', space=vmem, size = 0x12000, scoped, tag = 'internal scratch']
  #allocation2 [shape = 'f32[64,128]{1,0:T(8,128)}', space=vmem, size = 0x8000, scoped, tag = 'scratch operand']
  #allocation3 [shape = 'f32[64,32]{1,0:T(8,128)}', space=vmem, size = 0x8000, scoped, tag = 'scratch operand']
  %s0 = inlined_call_operand.vmem [shape: bf16[64,16], index: 0, kind: input, shape index: {}]
  %s1 = inlined_call_operand.vmem [shape: s32[8,1], index: 1, kind: input, shape index: {}]
  %s2 = inlined_call_operand.vmem [shape: bf16[16,128], index: 2, kind: input, shape index: {}]
  %s3 = inlined_call_operand.vmem [shape: bf16[32,128], index: 3, kind: input, shape index: {}]
  %s4 = inlined_call_operand.vmem [shape: f32[1,128], index: 4, kind: input, shape index: {}]
  %s5 = inlined_call_operand.vmem [shape: bf16[32,128], index: 5, kind: input, shape index: {}]
  %s6 = inlined_call_operand.vmem [shape: bf16[32,128], index: 6, kind: input, shape index: {}]
  %s7 = inlined_call_operand.vmem [shape: f32[1,128], index: 7, kind: input, shape index: {}]
  %s8 = inlined_call_operand.vmem [shape: f32[32,8], index: 8, kind: input, shape index: {}]
  %s9 = inlined_call_operand.vmem [shape: f32[1,8], index: 9, kind: input, shape index: {}]
  %s10 = inlined_call_operand.hbm [shape: f32[8,8], index: 10, kind: output, shape index: {}]
  %s11 = sld [smem:[#allocation0]]
  $region50: #{tpu_custom_call.1} parent=0
    _
  %s13 = ssub.s32 1, %s11
  %s14 = scalar_select 0, %s13, %s11
  $region1: #{tpu_custom_call.1} parent=0
    #allocation4 [shape = 'u8[4096]{0}', space=vmem, size = 0x1000, scoped, tag = 'output window, operand 0, single buffered']
    #allocation5 [shape = 's32[1]{0}', space=sflag, size = 0x4, scoped, tag = 'scoped memory for tpu_custom_call.1']
    %15 = vsyncpa [#allocation5], 0
    // Predicated region
    $region2: #{tpu_custom_call.1} parent=1 // pred_check
      _
    $region3: #{tpu_custom_call.1} parent=1 // pred_check_branch
      %17 = sbr.rel (0) target = $region5
    $region4: #{tpu_custom_call.1} parent=1 // pred_region
      _
    $region5: #{tpu_custom_call.1} parent=1 // pred_fallthru
      _
    // Predicated region
    $region6: #{tpu_custom_call.1} parent=1 // pred_check
      _
    $region7: #{tpu_custom_call.1} parent=1 // pred_check_branch
      %19 = sbr.rel (0) target = $region9
    $region8: #{tpu_custom_call.1} parent=1 // pred_region
      _
    $region9: #{tpu_custom_call.1} parent=1 // pred_fallthru
      _
    // Predicated region
    $region10: #{tpu_custom_call.1} parent=1 // pred_check
      _
    $region11: #{tpu_custom_call.1} parent=1 // pred_check_branch
      %21 = sbr.rel (0) target = $region13
    $region12: #{tpu_custom_call.1} parent=1 // pred_region
      _
    $region13: #{tpu_custom_call.1} parent=1 // pred_fallthru
      _
    // Predicated region
    $region14: #{tpu_custom_call.1} parent=1 // pred_check
      _
    $region15: #{tpu_custom_call.1} parent=1 // pred_check_branch
      %23 = sbr.rel (0) target = $region17
    $region16: #{tpu_custom_call.1} parent=1 // pred_region
      _
    $region17: #{tpu_custom_call.1} parent=1 // pred_fallthru
      _
    // Predicated region
    $region18: #{tpu_custom_call.1} parent=1 // pred_check
      _
    $region19: #{tpu_custom_call.1} parent=1 // pred_check_branch
      %25 = sbr.rel (0) target = $region21
    $region20: #{tpu_custom_call.1} parent=1 // pred_region
      _
    $region21: #{tpu_custom_call.1} parent=1 // pred_fallthru
      _
    // Predicated region
    $region22: #{tpu_custom_call.1} parent=1 // pred_check
      _
    $region23: #{tpu_custom_call.1} parent=1 // pred_check_branch
      %27 = sbr.rel (0) target = $region25
    $region24: #{tpu_custom_call.1} parent=1 // pred_region
      _
    $region25: #{tpu_custom_call.1} parent=1 // pred_fallthru
      _
    // Predicated region
    $region26: #{tpu_custom_call.1} parent=1 // pred_check
      _
    $region27: #{tpu_custom_call.1} parent=1 // pred_check_branch
      %29 = sbr.rel (0) target = $region29
    $region28: #{tpu_custom_call.1} parent=1 // pred_region
      _
    $region29: #{tpu_custom_call.1} parent=1 // pred_fallthru
      _
    // Predicated region
    $region30: #{tpu_custom_call.1} parent=1 // pred_check
      _
    $region31: #{tpu_custom_call.1} parent=1 // pred_check_branch
      %31 = sbr.rel (0) target = $region33
    $region32: #{tpu_custom_call.1} parent=1 // pred_region
      _
    $region33: #{tpu_custom_call.1} parent=1 // pred_fallthru
      _
    // Predicated region
    $region34: #{tpu_custom_call.1} parent=1 // pred_check
      _
    $region35: #{tpu_custom_call.1} parent=1 // pred_check_branch
      %33 = sbr.rel (0) target = $region37
    $region36: #{tpu_custom_call.1} parent=1 // pred_region
      _
    $region37: #{tpu_custom_call.1} parent=1 // pred_fallthru
      _
    // Predicated region
    $region38: #{tpu_custom_call.1} parent=1 // pred_check
      _
    $region39: #{tpu_custom_call.1} parent=1 // pred_check_branch
      %35 = sbr.rel (0) target = $region41
    $region40: #{tpu_custom_call.1} parent=1 // pred_region
      _
    $region41: #{tpu_custom_call.1} parent=1 // pred_fallthru
      _
    %v37 = vld [vmem:[%s1] sm:$0xff]
    %v38 = vsub.s32 %v37, 1
    %v39 = vlaneseq
    %v40 = vand.u32 %v39, 127
    %vm41 = vcmp.ge.s32.totalorder %v40, 64
    %vm42 = vcmp.lt.s32.totalorder %v40, 96
    %vm43 = vmand %vm41, %vm42
    %v44 = vsel %vm43, 1.0, 0.5
    %v45 = vsel %vm43, 0.0, 0.5
    %v46 = vld [vmem:[%s2] sm:$0xf]
    %v47 = vld [vmem:[%s2 + $0x4] sm:$0xf]
    %v48 = vld [vmem:[%s3] sm:$0xf]
    %v49 = vld [vmem:[%s3 + $0x4] sm:$0xf]
    %v50 = vld [vmem:[%s3 + $0x8] sm:$0xf]
    %v51 = vld [vmem:[%s3 + $0xc] sm:$0xf]
    %v52 = vld [vmem:[%s4] sm:$0x1]
    %v53 = vld [vmem:[%s0] sm:$0xf]
    %v54 = vld [vmem:[%s0 + $0x4] sm:$0xf]
    %v55 = vld [vmem:[%s0 + $0x8] sm:$0xf]
    %v56 = vld [vmem:[%s0 + $0xc] sm:$0xf]
    %v57 = vld [vmem:[%s0 + $0x10] sm:$0xf]
    %v58 = vld [vmem:[%s0 + $0x14] sm:$0xf]
    %v59 = vld [vmem:[%s0 + $0x18] sm:$0xf]
    %v60 = vld [vmem:[%s0 + $0x1c] sm:$0xf]
    %v62 = vlaneseq
    %v63 = vshrl.u32 %v62, 7
    %v64 = vsub.s32 0, %v63
    %v65 = vrot.slane %v52, %v64
    %v75 = vunpack.c.l.b16 %v53
    %v76 = vunpack.c.l.b16 %v54
    %v77 = vunpack.c.l.b16 %v55
    %v78 = vunpack.c.l.b16 %v56
    %v79 = vunpack.c.l.b16 %v57
    %v80 = vunpack.c.l.b16 %v58
    %v81 = vunpack.c.l.b16 %v59
    %v82 = vunpack.c.l.b16 %v60
    %v83 = vpack.c.b16 %v76, %v75
    %v84 = vpack.c.b16 %v78, %v77
    %v85 = vpack.c.b16 %v80, %v79
    %v86 = vpack.c.b16 %v82, %v81
    %v89 = vunpack.c.l.b16 %v46
    %v90 = vunpack.c.l.b16 %v47
    %v91 = vpack.c.b16 %v90, %v89
    %vm93 = vcmask 130048
    %v95 = vsel %vm93, %v83, 0
    %v98 = vsel %vm93, %v84, 0
    %v101 = vsel %vm93, %v85, 0
    %v104 = vsel %vm93, %v86, 0
    %106 = vmatprep.subr.bf16.mxu0 0
    %107 = vmatpush1.bf16.msra.mxu0 %v91
    %108 = vmatprep.subr.bf16.mxu0 0
    %109 = vmatpush1.bf16.msra.mxu0 0
    %110 = vmatprep.subr.bf16.mxu0 0
    %111 = vmatpush1.bf16.msra.mxu0 0
    %112 = vmatprep.subr.bf16.mxu0 0
    %113 = vmatpush1.bf16.msra.mxu0 0
    %114 = vmatprep.subr.bf16.mxu0 0
    %115 = vmatpush1.bf16.msra.mxu0 0
    %116 = vmatprep.subr.bf16.mxu0 0
    %117 = vmatpush1.bf16.msra.mxu0 0
    %118 = vmatprep.subr.bf16.mxu0 0
    %119 = vmatpush1.bf16.msra.mxu0 0
    %120 = vmatprep.subr.bf16.mxu0 0
    %121 = vmatpush1.bf16.msra.mxu0 0
    %122 = vmatprep.subr.bf16.mxu0 0
    %123 = vmatpush1.bf16.msra.mxu0 0
    %124 = vmatprep.subr.bf16.mxu0 0
    %125 = vmatpush1.bf16.msra.mxu0 0
    %126 = vmatprep.subr.bf16.mxu0 0
    %127 = vmatpush1.bf16.msra.mxu0 0
    %128 = vmatprep.subr.bf16.mxu0 0
    %129 = vmatpush1.bf16.msra.mxu0 0
    %130 = vmatprep.subr.bf16.mxu0 0
    %131 = vmatpush1.bf16.msra.mxu0 0
    %132 = vmatprep.subr.bf16.mxu0 0
    %133 = vmatpush1.bf16.msra.mxu0 0
    %134 = vmatprep.subr.bf16.mxu0 0
    %135 = vmatpush1.bf16.msra.mxu0 0
    %136 = vmatprep.subr.bf16.mxu0 0
    %137 = vmatpush1.bf16.msra.mxu0 0
    %138 = vmatprep.mubr.bf16.mxu0 0
    %139 = vmatmul.mubr.bf16.gmra.mrb[0].mxu0 %v95
    %v140 = vpop.f32.mrb[0].mxu0
    %v141 = vadd.f32 %v65, %v140
    %v142 = vpop.f32.mrb[0].mxu0
    %v143 = vpop.f32.mrb[0].mxu0
    %v144 = vadd.f32 %v65, %v143
    %v145 = vpop.f32.mrb[0].mxu0
    %146 = vmatprep.mubr.bf16.mxu0 0
    %147 = vmatmul.mubr.bf16.gmra.mrb[0].mxu0 %v98
    %v148 = vpop.f32.mrb[0].mxu0
    %v149 = vadd.f32 %v65, %v148
    %v150 = vpop.f32.mrb[0].mxu0
    %v151 = vpop.f32.mrb[0].mxu0
    %v152 = vadd.f32 %v65, %v151
    %v153 = vpop.f32.mrb[0].mxu0
    %154 = vmatprep.mubr.bf16.mxu0 0
    %155 = vmatmul.mubr.bf16.gmra.mrb[0].mxu0 %v101
    %v156 = vpop.f32.mrb[0].mxu0
    %v157 = vadd.f32 %v65, %v156
    %v158 = vpop.f32.mrb[0].mxu0
    %v159 = vpop.f32.mrb[0].mxu0
    %v160 = vadd.f32 %v65, %v159
    %v161 = vpop.f32.mrb[0].mxu0
    %162 = vmatprep.mubr.bf16.mxu0 0
    %163 = vmatmul.mubr.bf16.gmra.mrb[0].mxu0 %v104
    %v164 = vpop.f32.mrb[0].mxu0
    %v165 = vadd.f32 %v65, %v164
    %v166 = vpop.f32.mrb[0].mxu0
    %v167 = vpop.f32.mrb[0].mxu0
    %v168 = vadd.f32 %v65, %v167
    %v169 = vpop.f32.mrb[0].mxu0
    %170 = vdwg.mxu0
    %171 = vst [vmem:[#allocation2] sm:$0xff] %v141
    %172 = vst [vmem:[#allocation2 + $0x8] sm:$0xff] %v144
    %173 = vst [vmem:[#allocation2 + $0x10] sm:$0xff] %v149
    %174 = vst [vmem:[#allocation2 + $0x18] sm:$0xff] %v152
    %175 = vst [vmem:[#allocation2 + $0x20] sm:$0xff] %v157
    %176 = vst [vmem:[#allocation2 + $0x28] sm:$0xff] %v160
    %177 = vst [vmem:[#allocation2 + $0x30] sm:$0xff] %v165
    %178 = vst [vmem:[#allocation2 + $0x38] sm:$0xff] %v168
    %v179 = vld [vmem:[#allocation2] sm:$0xff]
    %v184 = vunpack.c.l.b16 %v48
    %v185 = vunpack.c.l.b16 %v49
    %v186 = vunpack.c.l.b16 %v50
    %v187 = vunpack.c.l.b16 %v51
    %v188 = vpack.c.b16 %v185, %v184
    %v189 = vpack.c.b16 %v187, %v186
    %vm192 = vcmask 261120
    %v194 = vsel %vm192, 0, 0
    %196 = vmatprep.subr.bf16.mxu0 0
    %197 = vmatpush1.bf16.msra.mxu0 %v188
    %198 = vmatprep.subr.bf16.mxu0 0
    %199 = vmatpush1.bf16.msra.mxu0 %v189
    %200 = vmatprep.subr.bf16.mxu0 0
    %201 = vmatpush1.bf16.msra.mxu0 0
    %202 = vmatprep.subr.bf16.mxu0 0
    %203 = vmatpush1.bf16.msra.mxu0 0
    %204 = vmatprep.subr.bf16.mxu0 0
    %205 = vmatpush1.bf16.msra.mxu0 0
    %206 = vmatprep.subr.bf16.mxu0 0
    %207 = vmatpush1.bf16.msra.mxu0 0
    %208 = vmatprep.subr.bf16.mxu0 0
    %209 = vmatpush1.bf16.msra.mxu0 0
    %210 = vmatprep.subr.bf16.mxu0 0
    %211 = vmatpush1.bf16.msra.mxu0 0
    %212 = vmatprep.subr.bf16.mxu0 0
    %213 = vmatpush1.bf16.msra.mxu0 0
    %214 = vmatprep.subr.bf16.mxu0 0
    %215 = vmatpush1.bf16.msra.mxu0 0
    %216 = vmatprep.subr.bf16.mxu0 0
    %217 = vmatpush1.bf16.msra.mxu0 0
    %218 = vmatprep.subr.bf16.mxu0 0
    %219 = vmatpush1.bf16.msra.mxu0 0
    %220 = vmatprep.subr.bf16.mxu0 0
    %221 = vmatpush1.bf16.msra.mxu0 0
    %222 = vmatprep.subr.bf16.mxu0 0
    %223 = vmatpush1.bf16.msra.mxu0 0
    %224 = vmatprep.subr.bf16.mxu0 0
    %225 = vmatpush1.bf16.msra.mxu0 0
    %226 = vmatprep.subr.bf16.mxu0 0
    %227 = vmatpush1.bf16.msra.mxu0 0
    %228 = vmatprep.mubr.bf16.mxu0 0
    %229 = vmatmul.mubr.bf16.gmra.mrb[0].mxu0 %v194
    %v230 = vpop.f32.mrb[0].mxu0
    %v231 = vadd.f32 0.0, %v230
    %v232 = vpop.f32.mrb[0].mxu0
    %v233 = vpop.f32.mrb[0].mxu0
    %v234 = vpop.f32.mrb[0].mxu0
    %235 = vdwg.mxu0
    %v236 = vadd.f32 %v179, %v231
    %v237 = vmul.f32 %v236, %v44
    %v238 = vtanh.pop %v237
    %v239 = vmul.f32 %v238, %v44
    %v240 = vadd.f32 %v239, %v45
    %v241 = vmul.f32 %v240, 0.0
    %243 = vrot.lane.b32.xlu0 %v240, 64
    %v244 = vpop.permute.xlu0 %243
    %v246 = vmul.f32 %v240, %v244
    %248 = vrot.lane.b32.xlu0 %v246, 32
    %v249 = vpop.permute.xlu0 %248
    %v251 = vadd.f32 %v241, %v249
    %v252 = vtanh.pop %v251
    %254 = vrot.lane.b32.xlu0 %v252, 64
    %v255 = vpop.permute.xlu0 %254
    %v257 = vmul.f32 %v240, %v255
    %259 = vrot.lane.b32.xlu0 %v257, 32
    %v260 = vpop.permute.xlu0 %259
    %262 = vst.msk [vmem:[#allocation3] sm:$0xff] %vm192, %v260
    %v263 = vld [vmem:[#allocation2 + $0x8] sm:$0xff]
    %v264 = vpack.c.bf16 %v257, %v257
    %266 = vrot.lane.b32.xlu0 %v264, 32
    %v267 = vpop.permute.xlu0 %266
    %v269 = vsel %vm192, %v267, 0
    %271 = vmatprep.subr.bf16.mxu0 0
    %272 = vmatpush1.bf16.msra.mxu0 %v188
    %273 = vmatprep.subr.bf16.mxu0 0
    %274 = vmatpush1.bf16.msra.mxu0 %v189
    %275 = vmatprep.subr.bf16.mxu0 0
    %276 = vmatpush1.bf16.msra.mxu0 0
    %277 = vmatprep.subr.bf16.mxu0 0
    %278 = vmatpush1.bf16.msra.mxu0 0
    %279 = vmatprep.subr.bf16.mxu0 0
    %280 = vmatpush1.bf16.msra.mxu0 0
    %281 = vmatprep.subr.bf16.mxu0 0
    %282 = vmatpush1.bf16.msra.mxu0 0
    %283 = vmatprep.subr.bf16.mxu0 0
    %284 = vmatpush1.bf16.msra.mxu0 0
    %285 = vmatprep.subr.bf16.mxu0 0
    %286 = vmatpush1.bf16.msra.mxu0 0
    %287 = vmatprep.subr.bf16.mxu0 0
    %288 = vmatpush1.bf16.msra.mxu0 0
    %289 = vmatprep.subr.bf16.mxu0 0
    %290 = vmatpush1.bf16.msra.mxu0 0
    %291 = vmatprep.subr.bf16.mxu0 0
    %292 = vmatpush1.bf16.msra.mxu0 0
    %293 = vmatprep.subr.bf16.mxu0 0
    %294 = vmatpush1.bf16.msra.mxu0 0
    %295 = vmatprep.subr.bf16.mxu0 0
    %296 = vmatpush1.bf16.msra.mxu0 0
    %297 = vmatprep.subr.bf16.mxu0 0
    %298 = vmatpush1.bf16.msra.mxu0 0
    %299 = vmatprep.subr.bf16.mxu0 0
    %300 = vmatpush1.bf16.msra.mxu0 0
    %301 = vmatprep.subr.bf16.mxu0 0
    %302 = vmatpush1.bf16.msra.mxu0 0
    %303 = vmatprep.mubr.bf16.mxu0 0
    %304 = vmatmul.mubr.bf16.gmra.mrb[0].mxu0 %v269
    %v305 = vpop.f32.mrb[0].mxu0
    %v306 = vadd.f32 0.0, %v305
    %v307 = vpop.f32.mrb[0].mxu0
    %v308 = vpop.f32.mrb[0].mxu0
    %v309 = vpop.f32.mrb[0].mxu0
    %310 = vdwg.mxu0
    %v311 = vadd.f32 %v263, %v306
    %v312 = vmul.f32 %v311, %v44
    %v313 = vtanh.pop %v312
    %v314 = vmul.f32 %v313, %v44
    %v315 = vadd.f32 %v314, %v45
    %v316 = vmul.f32 %v315, %v251
    %318 = vrot.lane.b32.xlu0 %v315, 64
    %v319 = vpop.permute.xlu0 %318
    %v321 = vmul.f32 %v315, %v319
    %323 = vrot.lane.b32.xlu0 %v321, 32
    %v324 = vpop.permute.xlu0 %323
    %v326 = vadd.f32 %v316, %v324
    %v327 = vtanh.pop %v326
    %329 = vrot.lane.b32.xlu0 %v327, 64
    %v330 = vpop.permute.xlu0 %329
    %v332 = vmul.f32 %v315, %v330
    %334 = vrot.lane.b32.xlu0 %v332, 32
    %v335 = vpop.permute.xlu0 %334
    %337 = vst.msk [vmem:[#allocation3 + $0x8] sm:$0xff] %vm192, %v335
    %v338 = vld [vmem:[#allocation2 + $0x10] sm:$0xff]
    %v339 = vpack.c.bf16 %v332, %v332
    %341 = vrot.lane.b32.xlu0 %v339, 32
    %v342 = vpop.permute.xlu0 %341
    %v344 = vsel %vm192, %v342, 0
    %346 = vmatprep.subr.bf16.mxu0 0
    %347 = vmatpush1.bf16.msra.mxu0 %v188
    %348 = vmatprep.subr.bf16.mxu0 0
    %349 = vmatpush1.bf16.msra.mxu0 %v189
    %350 = vmatprep.subr.bf16.mxu0 0
    %351 = vmatpush1.bf16.msra.mxu0 0
    %352 = vmatprep.subr.bf16.mxu0 0
    %353 = vmatpush1.bf16.msra.mxu0 0
    %354 = vmatprep.subr.bf16.mxu0 0
    %355 = vmatpush1.bf16.msra.mxu0 0
    %356 = vmatprep.subr.bf16.mxu0 0
    %357 = vmatpush1.bf16.msra.mxu0 0
    %358 = vmatprep.subr.bf16.mxu0 0
    %359 = vmatpush1.bf16.msra.mxu0 0
    %360 = vmatprep.subr.bf16.mxu0 0
    %361 = vmatpush1.bf16.msra.mxu0 0
    %362 = vmatprep.subr.bf16.mxu0 0
    %363 = vmatpush1.bf16.msra.mxu0 0
    %364 = vmatprep.subr.bf16.mxu0 0
    %365 = vmatpush1.bf16.msra.mxu0 0
    %366 = vmatprep.subr.bf16.mxu0 0
    %367 = vmatpush1.bf16.msra.mxu0 0
    %368 = vmatprep.subr.bf16.mxu0 0
    %369 = vmatpush1.bf16.msra.mxu0 0
    %370 = vmatprep.subr.bf16.mxu0 0
    %371 = vmatpush1.bf16.msra.mxu0 0
    %372 = vmatprep.subr.bf16.mxu0 0
    %373 = vmatpush1.bf16.msra.mxu0 0
    %374 = vmatprep.subr.bf16.mxu0 0
    %375 = vmatpush1.bf16.msra.mxu0 0
    %376 = vmatprep.subr.bf16.mxu0 0
    %377 = vmatpush1.bf16.msra.mxu0 0
    %378 = vmatprep.mubr.bf16.mxu0 0
    %379 = vmatmul.mubr.bf16.gmra.mrb[0].mxu0 %v344
    %v380 = vpop.f32.mrb[0].mxu0
    %v381 = vadd.f32 0.0, %v380
    %v382 = vpop.f32.mrb[0].mxu0
    %v383 = vpop.f32.mrb[0].mxu0
    %v384 = vpop.f32.mrb[0].mxu0
    %385 = vdwg.mxu0
    %v386 = vadd.f32 %v338, %v381
    %v387 = vmul.f32 %v386, %v44
    %v388 = vtanh.pop %v387
    %v389 = vmul.f32 %v388, %v44
    %v390 = vadd.f32 %v389, %v45
    %v391 = vmul.f32 %v390, %v326
    %393 = vrot.lane.b32.xlu0 %v390, 64
    %v394 = vpop.permute.xlu0 %393
    %v396 = vmul.f32 %v390, %v394
    %398 = vrot.lane.b32.xlu0 %v396, 32
    %v399 = vpop.permute.xlu0 %398
    %v401 = vadd.f32 %v391, %v399
    %v402 = vtanh.pop %v401
    %404 = vrot.lane.b32.xlu0 %v402, 64
    %v405 = vpop.permute.xlu0 %404
    %v407 = vmul.f32 %v390, %v405
    %409 = vrot.lane.b32.xlu0 %v407, 32
    %v410 = vpop.permute.xlu0 %409
    %412 = vst.msk [vmem:[#allocation3 + $0x10] sm:$0xff] %vm192, %v410
    %v413 = vld [vmem:[#allocation2 + $0x18] sm:$0xff]
    %v414 = vpack.c.bf16 %v407, %v407
    %416 = vrot.lane.b32.xlu0 %v414, 32
    %v417 = vpop.permute.xlu0 %416
    %v419 = vsel %vm192, %v417, 0
    %421 = vmatprep.subr.bf16.mxu0 0
    %422 = vmatpush1.bf16.msra.mxu0 %v188
    %423 = vmatprep.subr.bf16.mxu0 0
    %424 = vmatpush1.bf16.msra.mxu0 %v189
    %425 = vmatprep.subr.bf16.mxu0 0
    %426 = vmatpush1.bf16.msra.mxu0 0
    %427 = vmatprep.subr.bf16.mxu0 0
    %428 = vmatpush1.bf16.msra.mxu0 0
    %429 = vmatprep.subr.bf16.mxu0 0
    %430 = vmatpush1.bf16.msra.mxu0 0
    %431 = vmatprep.subr.bf16.mxu0 0
    %432 = vmatpush1.bf16.msra.mxu0 0
    %433 = vmatprep.subr.bf16.mxu0 0
    %434 = vmatpush1.bf16.msra.mxu0 0
    %435 = vmatprep.subr.bf16.mxu0 0
    %436 = vmatpush1.bf16.msra.mxu0 0
    %437 = vmatprep.subr.bf16.mxu0 0
    %438 = vmatpush1.bf16.msra.mxu0 0
    %439 = vmatprep.subr.bf16.mxu0 0
    %440 = vmatpush1.bf16.msra.mxu0 0
    %441 = vmatprep.subr.bf16.mxu0 0
    %442 = vmatpush1.bf16.msra.mxu0 0
    %443 = vmatprep.subr.bf16.mxu0 0
    %444 = vmatpush1.bf16.msra.mxu0 0
    %445 = vmatprep.subr.bf16.mxu0 0
    %446 = vmatpush1.bf16.msra.mxu0 0
    %447 = vmatprep.subr.bf16.mxu0 0
    %448 = vmatpush1.bf16.msra.mxu0 0
    %449 = vmatprep.subr.bf16.mxu0 0
    %450 = vmatpush1.bf16.msra.mxu0 0
    %451 = vmatprep.subr.bf16.mxu0 0
    %452 = vmatpush1.bf16.msra.mxu0 0
    %453 = vmatprep.mubr.bf16.mxu0 0
    %454 = vmatmul.mubr.bf16.gmra.mrb[0].mxu0 %v419
    %v455 = vpop.f32.mrb[0].mxu0
    %v456 = vadd.f32 0.0, %v455
    %v457 = vpop.f32.mrb[0].mxu0
    %v458 = vpop.f32.mrb[0].mxu0
    %v459 = vpop.f32.mrb[0].mxu0
    %460 = vdwg.mxu0
    %v461 = vadd.f32 %v413, %v456
    %v462 = vmul.f32 %v461, %v44
    %v463 = vtanh.pop %v462
    %v464 = vmul.f32 %v463, %v44
    %v465 = vadd.f32 %v464, %v45
    %v466 = vmul.f32 %v465, %v401
    %468 = vrot.lane.b32.xlu0 %v465, 64
    %v469 = vpop.permute.xlu0 %468
    %v471 = vmul.f32 %v465, %v469
    %473 = vrot.lane.b32.xlu0 %v471, 32
    %v474 = vpop.permute.xlu0 %473
    %v476 = vadd.f32 %v466, %v474
    %v477 = vtanh.pop %v476
    %479 = vrot.lane.b32.xlu0 %v477, 64
    %v480 = vpop.permute.xlu0 %479
    %v482 = vmul.f32 %v465, %v480
    %484 = vrot.lane.b32.xlu0 %v482, 32
    %v485 = vpop.permute.xlu0 %484
    %487 = vst.msk [vmem:[#allocation3 + $0x18] sm:$0xff] %vm192, %v485
    %v488 = vld [vmem:[#allocation2 + $0x20] sm:$0xff]
    %v489 = vpack.c.bf16 %v482, %v482
    %491 = vrot.lane.b32.xlu0 %v489, 32
    %v492 = vpop.permute.xlu0 %491
    %v494 = vsel %vm192, %v492, 0
    %496 = vmatprep.subr.bf16.mxu0 0
    %497 = vmatpush1.bf16.msra.mxu0 %v188
    %498 = vmatprep.subr.bf16.mxu0 0
    %499 = vmatpush1.bf16.msra.mxu0 %v189
    %500 = vmatprep.subr.bf16.mxu0 0
    %501 = vmatpush1.bf16.msra.mxu0 0
    %502 = vmatprep.subr.bf16.mxu0 0
    %503 = vmatpush1.bf16.msra.mxu0 0
    %504 = vmatprep.subr.bf16.mxu0 0
    %505 = vmatpush1.bf16.msra.mxu0 0
    %506 = vmatprep.subr.bf16.mxu0 0
    %507 = vmatpush1.bf16.msra.mxu0 0
    %508 = vmatprep.subr.bf16.mxu0 0
    %509 = vmatpush1.bf16.msra.mxu0 0
    %510 = vmatprep.subr.bf16.mxu0 0
    %511 = vmatpush1.bf16.msra.mxu0 0
    %512 = vmatprep.subr.bf16.mxu0 0
    %513 = vmatpush1.bf16.msra.mxu0 0
    %514 = vmatprep.subr.bf16.mxu0 0
    %515 = vmatpush1.bf16.msra.mxu0 0
    %516 = vmatprep.subr.bf16.mxu0 0
    %517 = vmatpush1.bf16.msra.mxu0 0
    %518 = vmatprep.subr.bf16.mxu0 0
    %519 = vmatpush1.bf16.msra.mxu0 0
    %520 = vmatprep.subr.bf16.mxu0 0
    %521 = vmatpush1.bf16.msra.mxu0 0
    %522 = vmatprep.subr.bf16.mxu0 0
    %523 = vmatpush1.bf16.msra.mxu0 0
    %524 = vmatprep.subr.bf16.mxu0 0
    %525 = vmatpush1.bf16.msra.mxu0 0
    %526 = vmatprep.subr.bf16.mxu0 0
    %527 = vmatpush1.bf16.msra.mxu0 0
    %528 = vmatprep.mubr.bf16.mxu0 0
    %529 = vmatmul.mubr.bf16.gmra.mrb[0].mxu0 %v494
    %v530 = vpop.f32.mrb[0].mxu0
    %v531 = vadd.f32 0.0, %v530
    %v532 = vpop.f32.mrb[0].mxu0
    %v533 = vpop.f32.mrb[0].mxu0
    %v534 = vpop.f32.mrb[0].mxu0
    %535 = vdwg.mxu0
    %v536 = vadd.f32 %v488, %v531
    %v537 = vmul.f32 %v536, %v44
    %v538 = vtanh.pop %v537
    %v539 = vmul.f32 %v538, %v44
    %v540 = vadd.f32 %v539, %v45
    %v541 = vmul.f32 %v540, %v476
    %543 = vrot.lane.b32.xlu0 %v540, 64
    %v544 = vpop.permute.xlu0 %543
    %v546 = vmul.f32 %v540, %v544
    %548 = vrot.lane.b32.xlu0 %v546, 32
    %v549 = vpop.permute.xlu0 %548
    %v551 = vadd.f32 %v541, %v549
    %v552 = vtanh.pop %v551
    %554 = vrot.lane.b32.xlu0 %v552, 64
    %v555 = vpop.permute.xlu0 %554
    %v557 = vmul.f32 %v540, %v555
    %559 = vrot.lane.b32.xlu0 %v557, 32
    %v560 = vpop.permute.xlu0 %559
    %562 = vst.msk [vmem:[#allocation3 + $0x20] sm:$0xff] %vm192, %v560
    %v563 = vld [vmem:[#allocation2 + $0x28] sm:$0xff]
    %v564 = vpack.c.bf16 %v557, %v557
    %566 = vrot.lane.b32.xlu0 %v564, 32
    %v567 = vpop.permute.xlu0 %566
    %v569 = vsel %vm192, %v567, 0
    %571 = vmatprep.subr.bf16.mxu0 0
    %572 = vmatpush1.bf16.msra.mxu0 %v188
    %573 = vmatprep.subr.bf16.mxu0 0
    %574 = vmatpush1.bf16.msra.mxu0 %v189
    %575 = vmatprep.subr.bf16.mxu0 0
    %576 = vmatpush1.bf16.msra.mxu0 0
    %577 = vmatprep.subr.bf16.mxu0 0
    %578 = vmatpush1.bf16.msra.mxu0 0
    %579 = vmatprep.subr.bf16.mxu0 0
    %580 = vmatpush1.bf16.msra.mxu0 0
    %581 = vmatprep.subr.bf16.mxu0 0
    %582 = vmatpush1.bf16.msra.mxu0 0
    %583 = vmatprep.subr.bf16.mxu0 0
    %584 = vmatpush1.bf16.msra.mxu0 0
    %585 = vmatprep.subr.bf16.mxu0 0
    %586 = vmatpush1.bf16.msra.mxu0 0
    %587 = vmatprep.subr.bf16.mxu0 0
    %588 = vmatpush1.bf16.msra.mxu0 0
    %589 = vmatprep.subr.bf16.mxu0 0
    %590 = vmatpush1.bf16.msra.mxu0 0
    %591 = vmatprep.subr.bf16.mxu0 0
    %592 = vmatpush1.bf16.msra.mxu0 0
    %593 = vmatprep.subr.bf16.mxu0 0
    %594 = vmatpush1.bf16.msra.mxu0 0
    %595 = vmatprep.subr.bf16.mxu0 0
    %596 = vmatpush1.bf16.msra.mxu0 0
    %597 = vmatprep.subr.bf16.mxu0 0
    %598 = vmatpush1.bf16.msra.mxu0 0
    %599 = vmatprep.subr.bf16.mxu0 0
    %600 = vmatpush1.bf16.msra.mxu0 0
    %601 = vmatprep.subr.bf16.mxu0 0
    %602 = vmatpush1.bf16.msra.mxu0 0
    %603 = vmatprep.mubr.bf16.mxu0 0
    %604 = vmatmul.mubr.bf16.gmra.mrb[0].mxu0 %v569
    %v605 = vpop.f32.mrb[0].mxu0
    %v606 = vadd.f32 0.0, %v605
    %v607 = vpop.f32.mrb[0].mxu0
    %v608 = vpop.f32.mrb[0].mxu0
    %v609 = vpop.f32.mrb[0].mxu0
    %610 = vdwg.mxu0
    %v611 = vadd.f32 %v563, %v606
    %v612 = vmul.f32 %v611, %v44
    %v613 = vtanh.pop %v612
    %v614 = vmul.f32 %v613, %v44
    %v615 = vadd.f32 %v614, %v45
    %v616 = vmul.f32 %v615, %v551
    %618 = vrot.lane.b32.xlu0 %v615, 64
    %v619 = vpop.permute.xlu0 %618
    %v621 = vmul.f32 %v615, %v619
    %623 = vrot.lane.b32.xlu0 %v621, 32
    %v624 = vpop.permute.xlu0 %623
    %v626 = vadd.f32 %v616, %v624
    %v627 = vtanh.pop %v626
    %629 = vrot.lane.b32.xlu0 %v627, 64
    %v630 = vpop.permute.xlu0 %629
    %v632 = vmul.f32 %v615, %v630
    %634 = vrot.lane.b32.xlu0 %v632, 32
    %v635 = vpop.permute.xlu0 %634
    %637 = vst.msk [vmem:[#allocation3 + $0x28] sm:$0xff] %vm192, %v635
    %v638 = vld [vmem:[#allocation2 + $0x30] sm:$0xff]
    %v639 = vpack.c.bf16 %v632, %v632
    %641 = vrot.lane.b32.xlu0 %v639, 32
    %v642 = vpop.permute.xlu0 %641
    %v644 = vsel %vm192, %v642, 0
    %646 = vmatprep.subr.bf16.mxu0 0
    %647 = vmatpush1.bf16.msra.mxu0 %v188
    %648 = vmatprep.subr.bf16.mxu0 0
    %649 = vmatpush1.bf16.msra.mxu0 %v189
    %650 = vmatprep.subr.bf16.mxu0 0
    %651 = vmatpush1.bf16.msra.mxu0 0
    %652 = vmatprep.subr.bf16.mxu0 0
    %653 = vmatpush1.bf16.msra.mxu0 0
    %654 = vmatprep.subr.bf16.mxu0 0
    %655 = vmatpush1.bf16.msra.mxu0 0
    %656 = vmatprep.subr.bf16.mxu0 0
    %657 = vmatpush1.bf16.msra.mxu0 0
    %658 = vmatprep.subr.bf16.mxu0 0
    %659 = vmatpush1.bf16.msra.mxu0 0
    %660 = vmatprep.subr.bf16.mxu0 0
    %661 = vmatpush1.bf16.msra.mxu0 0
    %662 = vmatprep.subr.bf16.mxu0 0
    %663 = vmatpush1.bf16.msra.mxu0 0
    %664 = vmatprep.subr.bf16.mxu0 0
    %665 = vmatpush1.bf16.msra.mxu0 0
    %666 = vmatprep.subr.bf16.mxu0 0
    %667 = vmatpush1.bf16.msra.mxu0 0
    %668 = vmatprep.subr.bf16.mxu0 0
    %669 = vmatpush1.bf16.msra.mxu0 0
    %670 = vmatprep.subr.bf16.mxu0 0
    %671 = vmatpush1.bf16.msra.mxu0 0
    %672 = vmatprep.subr.bf16.mxu0 0
    %673 = vmatpush1.bf16.msra.mxu0 0
    %674 = vmatprep.subr.bf16.mxu0 0
    %675 = vmatpush1.bf16.msra.mxu0 0
    %676 = vmatprep.subr.bf16.mxu0 0
    %677 = vmatpush1.bf16.msra.mxu0 0
    %678 = vmatprep.mubr.bf16.mxu0 0
    %679 = vmatmul.mubr.bf16.gmra.mrb[0].mxu0 %v644
    %v680 = vpop.f32.mrb[0].mxu0
    %v681 = vadd.f32 0.0, %v680
    %v682 = vpop.f32.mrb[0].mxu0
    %v683 = vpop.f32.mrb[0].mxu0
    %v684 = vpop.f32.mrb[0].mxu0
    %685 = vdwg.mxu0
    %v686 = vadd.f32 %v638, %v681
    %v687 = vmul.f32 %v686, %v44
    %v688 = vtanh.pop %v687
    %v689 = vmul.f32 %v688, %v44
    %v690 = vadd.f32 %v689, %v45
    %v691 = vmul.f32 %v690, %v626
    %693 = vrot.lane.b32.xlu0 %v690, 64
    %v694 = vpop.permute.xlu0 %693
    %v696 = vmul.f32 %v690, %v694
    %698 = vrot.lane.b32.xlu0 %v696, 32
    %v699 = vpop.permute.xlu0 %698
    %v701 = vadd.f32 %v691, %v699
    %v702 = vtanh.pop %v701
    %704 = vrot.lane.b32.xlu0 %v702, 64
    %v705 = vpop.permute.xlu0 %704
    %v707 = vmul.f32 %v690, %v705
    %709 = vrot.lane.b32.xlu0 %v707, 32
    %v710 = vpop.permute.xlu0 %709
    %712 = vst.msk [vmem:[#allocation3 + $0x30] sm:$0xff] %vm192, %v710
    %v713 = vld [vmem:[#allocation2 + $0x38] sm:$0xff]
    %v714 = vpack.c.bf16 %v707, %v707
    %716 = vrot.lane.b32.xlu0 %v714, 32
    %v717 = vpop.permute.xlu0 %716
    %v719 = vsel %vm192, %v717, 0
    %721 = vmatprep.subr.bf16.mxu0 0
    %722 = vmatpush1.bf16.msra.mxu0 %v188
    %723 = vmatprep.subr.bf16.mxu0 0
    %724 = vmatpush1.bf16.msra.mxu0 %v189
    %725 = vmatprep.subr.bf16.mxu0 0
    %726 = vmatpush1.bf16.msra.mxu0 0
    %727 = vmatprep.subr.bf16.mxu0 0
    %728 = vmatpush1.bf16.msra.mxu0 0
    %729 = vmatprep.subr.bf16.mxu0 0
    %730 = vmatpush1.bf16.msra.mxu0 0
    %731 = vmatprep.subr.bf16.mxu0 0
    %732 = vmatpush1.bf16.msra.mxu0 0
    %733 = vmatprep.subr.bf16.mxu0 0
    %734 = vmatpush1.bf16.msra.mxu0 0
    %735 = vmatprep.subr.bf16.mxu0 0
    %736 = vmatpush1.bf16.msra.mxu0 0
    %737 = vmatprep.subr.bf16.mxu0 0
    %738 = vmatpush1.bf16.msra.mxu0 0
    %739 = vmatprep.subr.bf16.mxu0 0
    %740 = vmatpush1.bf16.msra.mxu0 0
    %741 = vmatprep.subr.bf16.mxu0 0
    %742 = vmatpush1.bf16.msra.mxu0 0
    %743 = vmatprep.subr.bf16.mxu0 0
    %744 = vmatpush1.bf16.msra.mxu0 0
    %745 = vmatprep.subr.bf16.mxu0 0
    %746 = vmatpush1.bf16.msra.mxu0 0
    %747 = vmatprep.subr.bf16.mxu0 0
    %748 = vmatpush1.bf16.msra.mxu0 0
    %749 = vmatprep.subr.bf16.mxu0 0
    %750 = vmatpush1.bf16.msra.mxu0 0
    %751 = vmatprep.subr.bf16.mxu0 0
    %752 = vmatpush1.bf16.msra.mxu0 0
    %753 = vmatprep.mubr.bf16.mxu0 0
    %754 = vmatmul.mubr.bf16.gmra.mrb[0].mxu0 %v719
    %v755 = vpop.f32.mrb[0].mxu0
    %v756 = vadd.f32 0.0, %v755
    %v757 = vpop.f32.mrb[0].mxu0
    %v758 = vpop.f32.mrb[0].mxu0
    %v759 = vpop.f32.mrb[0].mxu0
    %760 = vdwg.mxu0
    %v761 = vadd.f32 %v713, %v756
    %v762 = vmul.f32 %v761, %v44
    %v763 = vtanh.pop %v762
    %v764 = vmul.f32 %v763, %v44
    %v765 = vadd.f32 %v764, %v45
    %v766 = vmul.f32 %v765, %v701
    %768 = vrot.lane.b32.xlu0 %v765, 64
    %v769 = vpop.permute.xlu0 %768
    %v771 = vmul.f32 %v765, %v769
    %773 = vrot.lane.b32.xlu0 %v771, 32
    %v774 = vpop.permute.xlu0 %773
    %v776 = vadd.f32 %v766, %v774
    %v777 = vtanh.pop %v776
    %779 = vrot.lane.b32.xlu0 %v777, 64
    %v780 = vpop.permute.xlu0 %779
    %v782 = vmul.f32 %v765, %v780
    %784 = vrot.lane.b32.xlu0 %v782, 32
    %v785 = vpop.permute.xlu0 %784
    %787 = vst.msk [vmem:[#allocation3 + $0x38] sm:$0xff] %vm192, %v785
    %v788 = vld [vmem:[%s5] sm:$0xf]
    %v789 = vld [vmem:[%s5 + $0x4] sm:$0xf]
    %v790 = vld [vmem:[%s5 + $0x8] sm:$0xf]
    %v791 = vld [vmem:[%s5 + $0xc] sm:$0xf]
    %v792 = vld [vmem:[%s6] sm:$0xf]
    %v793 = vld [vmem:[%s6 + $0x4] sm:$0xf]
    %v794 = vld [vmem:[%s6 + $0x8] sm:$0xf]
    %v795 = vld [vmem:[%s6 + $0xc] sm:$0xf]
    %v796 = vld [vmem:[%s7] sm:$0x1]
    %v797 = vld [vmem:[#allocation3] sm:$0xff]
    %v798 = vld [vmem:[#allocation3 + $0x8] sm:$0xff]
    %v799 = vld [vmem:[#allocation3 + $0x10] sm:$0xff]
    %v800 = vld [vmem:[#allocation3 + $0x18] sm:$0xff]
    %v801 = vld [vmem:[#allocation3 + $0x20] sm:$0xff]
    %v802 = vld [vmem:[#allocation3 + $0x28] sm:$0xff]
    %v803 = vld [vmem:[#allocation3 + $0x30] sm:$0xff]
    %v804 = vld [vmem:[#allocation3 + $0x38] sm:$0xff]
    %v805 = vpack.c.bf16 %v798, %v797
    %v806 = vpack.c.bf16 %v800, %v799
    %v807 = vpack.c.bf16 %v802, %v801
    %v808 = vpack.c.bf16 %v804, %v803
    %v810 = vlaneseq
    %v811 = vshrl.u32 %v810, 7
    %v812 = vsub.s32 0, %v811
    %v813 = vrot.slane %v796, %v812
    %v819 = vunpack.c.l.b16 %v788
    %v820 = vunpack.c.l.b16 %v789
    %v821 = vunpack.c.l.b16 %v790
    %v822 = vunpack.c.l.b16 %v791
    %v823 = vpack.c.b16 %v820, %v819
    %v824 = vpack.c.b16 %v822, %v821
    %v828 = vsel %vm192, %v805, 0
    %v831 = vsel %vm192, %v806, 0
    %v834 = vsel %vm192, %v807, 0
    %v837 = vsel %vm192, %v808, 0
    %839 = vmatprep.subr.bf16.mxu0 0
    %840 = vmatpush1.bf16.msra.mxu0 %v823
    %841 = vmatprep.subr.bf16.mxu0 0
    %842 = vmatpush1.bf16.msra.mxu0 %v824
    %843 = vmatprep.subr.bf16.mxu0 0
    %844 = vmatpush1.bf16.msra.mxu0 0
    %845 = vmatprep.subr.bf16.mxu0 0
    %846 = vmatpush1.bf16.msra.mxu0 0
    %847 = vmatprep.subr.bf16.mxu0 0
    %848 = vmatpush1.bf16.msra.mxu0 0
    %849 = vmatprep.subr.bf16.mxu0 0
    %850 = vmatpush1.bf16.msra.mxu0 0
    %851 = vmatprep.subr.bf16.mxu0 0
    %852 = vmatpush1.bf16.msra.mxu0 0
    %853 = vmatprep.subr.bf16.mxu0 0
    %854 = vmatpush1.bf16.msra.mxu0 0
    %855 = vmatprep.subr.bf16.mxu0 0
    %856 = vmatpush1.bf16.msra.mxu0 0
    %857 = vmatprep.subr.bf16.mxu0 0
    %858 = vmatpush1.bf16.msra.mxu0 0
    %859 = vmatprep.subr.bf16.mxu0 0
    %860 = vmatpush1.bf16.msra.mxu0 0
    %861 = vmatprep.subr.bf16.mxu0 0
    %862 = vmatpush1.bf16.msra.mxu0 0
    %863 = vmatprep.subr.bf16.mxu0 0
    %864 = vmatpush1.bf16.msra.mxu0 0
    %865 = vmatprep.subr.bf16.mxu0 0
    %866 = vmatpush1.bf16.msra.mxu0 0
    %867 = vmatprep.subr.bf16.mxu0 0
    %868 = vmatpush1.bf16.msra.mxu0 0
    %869 = vmatprep.subr.bf16.mxu0 0
    %870 = vmatpush1.bf16.msra.mxu0 0
    %871 = vmatprep.mubr.bf16.mxu0 0
    %872 = vmatmul.mubr.bf16.gmra.mrb[0].mxu0 %v828
    %v873 = vpop.f32.mrb[0].mxu0
    %v874 = vadd.f32 %v813, %v873
    %v875 = vpop.f32.mrb[0].mxu0
    %v876 = vpop.f32.mrb[0].mxu0
    %v877 = vadd.f32 %v813, %v876
    %v878 = vpop.f32.mrb[0].mxu0
    %879 = vmatprep.mubr.bf16.mxu0 0
    %880 = vmatmul.mubr.bf16.gmra.mrb[0].mxu0 %v831
    %v881 = vpop.f32.mrb[0].mxu0
    %v882 = vadd.f32 %v813, %v881
    %v883 = vpop.f32.mrb[0].mxu0
    %v884 = vpop.f32.mrb[0].mxu0
    %v885 = vadd.f32 %v813, %v884
    %v886 = vpop.f32.mrb[0].mxu0
    %887 = vmatprep.mubr.bf16.mxu0 0
    %888 = vmatmul.mubr.bf16.gmra.mrb[0].mxu0 %v834
    %v889 = vpop.f32.mrb[0].mxu0
    %v890 = vadd.f32 %v813, %v889
    %v891 = vpop.f32.mrb[0].mxu0
    %v892 = vpop.f32.mrb[0].mxu0
    %v893 = vadd.f32 %v813, %v892
    %v894 = vpop.f32.mrb[0].mxu0
    %895 = vmatprep.mubr.bf16.mxu0 0
    %896 = vmatmul.mubr.bf16.gmra.mrb[0].mxu0 %v837
    %v897 = vpop.f32.mrb[0].mxu0
    %v898 = vadd.f32 %v813, %v897
    %v899 = vpop.f32.mrb[0].mxu0
    %v900 = vpop.f32.mrb[0].mxu0
    %v901 = vadd.f32 %v813, %v900
    %v902 = vpop.f32.mrb[0].mxu0
    %903 = vdwg.mxu0
    %904 = vst [vmem:[#allocation2] sm:$0xff] %v874
    %905 = vst [vmem:[#allocation2 + $0x8] sm:$0xff] %v877
    %906 = vst [vmem:[#allocation2 + $0x10] sm:$0xff] %v882
    %907 = vst [vmem:[#allocation2 + $0x18] sm:$0xff] %v885
    %908 = vst [vmem:[#allocation2 + $0x20] sm:$0xff] %v890
    %909 = vst [vmem:[#allocation2 + $0x28] sm:$0xff] %v893
    %910 = vst [vmem:[#allocation2 + $0x30] sm:$0xff] %v898
    %911 = vst [vmem:[#allocation2 + $0x38] sm:$0xff] %v901
    %v912 = vld [vmem:[#allocation2] sm:$0xff]
    %v917 = vunpack.c.l.b16 %v792
    %v918 = vunpack.c.l.b16 %v793
    %v919 = vunpack.c.l.b16 %v794
    %v920 = vunpack.c.l.b16 %v795
    %v921 = vpack.c.b16 %v918, %v917
    %v922 = vpack.c.b16 %v920, %v919
    %925 = vmatprep.subr.bf16.mxu0 0
    %926 = vmatpush1.bf16.msra.mxu0 %v921
    %927 = vmatprep.subr.bf16.mxu0 0
    %928 = vmatpush1.bf16.msra.mxu0 %v922
    %929 = vmatprep.subr.bf16.mxu0 0
    %930 = vmatpush1.bf16.msra.mxu0 0
    %931 = vmatprep.subr.bf16.mxu0 0
    %932 = vmatpush1.bf16.msra.mxu0 0
    %933 = vmatprep.subr.bf16.mxu0 0
    %934 = vmatpush1.bf16.msra.mxu0 0
    %935 = vmatprep.subr.bf16.mxu0 0
    %936 = vmatpush1.bf16.msra.mxu0 0
    %937 = vmatprep.subr.bf16.mxu0 0
    %938 = vmatpush1.bf16.msra.mxu0 0
    %939 = vmatprep.subr.bf16.mxu0 0
    %940 = vmatpush1.bf16.msra.mxu0 0
    %941 = vmatprep.subr.bf16.mxu0 0
    %942 = vmatpush1.bf16.msra.mxu0 0
    %943 = vmatprep.subr.bf16.mxu0 0
    %944 = vmatpush1.bf16.msra.mxu0 0
    %945 = vmatprep.subr.bf16.mxu0 0
    %946 = vmatpush1.bf16.msra.mxu0 0
    %947 = vmatprep.subr.bf16.mxu0 0
    %948 = vmatpush1.bf16.msra.mxu0 0
    %949 = vmatprep.subr.bf16.mxu0 0
    %950 = vmatpush1.bf16.msra.mxu0 0
    %951 = vmatprep.subr.bf16.mxu0 0
    %952 = vmatpush1.bf16.msra.mxu0 0
    %953 = vmatprep.subr.bf16.mxu0 0
    %954 = vmatpush1.bf16.msra.mxu0 0
    %955 = vmatprep.subr.bf16.mxu0 0
    %956 = vmatpush1.bf16.msra.mxu0 0
    %957 = vmatprep.mubr.bf16.mxu0 0
    %958 = vmatmul.mubr.bf16.gmra.mrb[0].mxu0 %v194
    %v959 = vpop.f32.mrb[0].mxu0
    %v960 = vadd.f32 0.0, %v959
    %v961 = vpop.f32.mrb[0].mxu0
    %v962 = vpop.f32.mrb[0].mxu0
    %v963 = vpop.f32.mrb[0].mxu0
    %964 = vdwg.mxu0
    %v965 = vadd.f32 %v912, %v960
    %v966 = vmul.f32 %v965, %v44
    %v967 = vtanh.pop %v966
    %v968 = vmul.f32 %v967, %v44
    %v969 = vadd.f32 %v968, %v45
    %v970 = vmul.f32 %v969, 0.0
    %972 = vrot.lane.b32.xlu0 %v969, 64
    %v973 = vpop.permute.xlu0 %972
    %v975 = vmul.f32 %v969, %v973
    %977 = vrot.lane.b32.xlu0 %v975, 32
    %v978 = vpop.permute.xlu0 %977
    %v980 = vadd.f32 %v970, %v978
    %v981 = vtanh.pop %v980
    %983 = vrot.lane.b32.xlu0 %v981, 64
    %v984 = vpop.permute.xlu0 %983
    %v986 = vmul.f32 %v969, %v984
    %vm987 = vcmp.eq.s32.totalorder %v38, 0
    %v988 = vsel %vm987, 1, 0
    %989 = vset.pattern.permute.xlu0 0
    %990 = vperm.xlu0 %989, %v988
    %v991 = vpop.permute.xlu0 %990
    %vm992 = vcmp.eq.s32.totalorder %v991, 1
    %v993 = vsel %vm992, %v986, 0.0
    %v994 = vld [vmem:[#allocation2 + $0x8] sm:$0xff]
    %v995 = vpack.c.bf16 %v986, %v986
    %997 = vrot.lane.b32.xlu0 %v995, 32
    %v998 = vpop.permute.xlu0 %997
    %v1000 = vsel %vm192, %v998, 0
    %1002 = vmatprep.subr.bf16.mxu0 0
    %1003 = vmatpush1.bf16.msra.mxu0 %v921
    %1004 = vmatprep.subr.bf16.mxu0 0
    %1005 = vmatpush1.bf16.msra.mxu0 %v922
    %1006 = vmatprep.subr.bf16.mxu0 0
    %1007 = vmatpush1.bf16.msra.mxu0 0
    %1008 = vmatprep.subr.bf16.mxu0 0
    %1009 = vmatpush1.bf16.msra.mxu0 0
    %1010 = vmatprep.subr.bf16.mxu0 0
    %1011 = vmatpush1.bf16.msra.mxu0 0
    %1012 = vmatprep.subr.bf16.mxu0 0
    %1013 = vmatpush1.bf16.msra.mxu0 0
    %1014 = vmatprep.subr.bf16.mxu0 0
    %1015 = vmatpush1.bf16.msra.mxu0 0
    %1016 = vmatprep.subr.bf16.mxu0 0
    %1017 = vmatpush1.bf16.msra.mxu0 0
    %1018 = vmatprep.subr.bf16.mxu0 0
    %1019 = vmatpush1.bf16.msra.mxu0 0
    %1020 = vmatprep.subr.bf16.mxu0 0
    %1021 = vmatpush1.bf16.msra.mxu0 0
    %1022 = vmatprep.subr.bf16.mxu0 0
    %1023 = vmatpush1.bf16.msra.mxu0 0
    %1024 = vmatprep.subr.bf16.mxu0 0
    %1025 = vmatpush1.bf16.msra.mxu0 0
    %1026 = vmatprep.subr.bf16.mxu0 0
    %1027 = vmatpush1.bf16.msra.mxu0 0
    %1028 = vmatprep.subr.bf16.mxu0 0
    %1029 = vmatpush1.bf16.msra.mxu0 0
    %1030 = vmatprep.subr.bf16.mxu0 0
    %1031 = vmatpush1.bf16.msra.mxu0 0
    %1032 = vmatprep.subr.bf16.mxu0 0
    %1033 = vmatpush1.bf16.msra.mxu0 0
    %1034 = vmatprep.mubr.bf16.mxu0 0
    %1035 = vmatmul.mubr.bf16.gmra.mrb[0].mxu0 %v1000
    %v1036 = vpop.f32.mrb[0].mxu0
    %v1037 = vadd.f32 0.0, %v1036
    %v1038 = vpop.f32.mrb[0].mxu0
    %v1039 = vpop.f32.mrb[0].mxu0
    %v1040 = vpop.f32.mrb[0].mxu0
    %1041 = vdwg.mxu0
    %v1042 = vadd.f32 %v994, %v1037
    %v1043 = vmul.f32 %v1042, %v44
    %v1044 = vtanh.pop %v1043
    %v1045 = vmul.f32 %v1044, %v44
    %v1046 = vadd.f32 %v1045, %v45
    %v1047 = vmul.f32 %v1046, %v980
    %1049 = vrot.lane.b32.xlu0 %v1046, 64
    %v1050 = vpop.permute.xlu0 %1049
    %v1052 = vmul.f32 %v1046, %v1050
    %1054 = vrot.lane.b32.xlu0 %v1052, 32
    %v1055 = vpop.permute.xlu0 %1054
    %v1057 = vadd.f32 %v1047, %v1055
    %v1058 = vtanh.pop %v1057
    %1060 = vrot.lane.b32.xlu0 %v1058, 64
    %v1061 = vpop.permute.xlu0 %1060
    %v1063 = vmul.f32 %v1046, %v1061
    %vm1064 = vcmp.eq.s32.totalorder %v38, 1
    %v1065 = vsel %vm1064, 1, 0
    %1066 = vset.pattern.permute.xlu0 0
    %1067 = vperm.xlu0 %1066, %v1065
    %v1068 = vpop.permute.xlu0 %1067
    %vm1069 = vcmp.eq.s32.totalorder %v1068, 1
    %v1070 = vsel %vm1069, %v1063, %v993
    %v1071 = vld [vmem:[#allocation2 + $0x10] sm:$0xff]
    %v1072 = vpack.c.bf16 %v1063, %v1063
    %1074 = vrot.lane.b32.xlu0 %v1072, 32
    %v1075 = vpop.permute.xlu0 %1074
    %v1077 = vsel %vm192, %v1075, 0
    %1079 = vmatprep.subr.bf16.mxu0 0
    %1080 = vmatpush1.bf16.msra.mxu0 %v921
    %1081 = vmatprep.subr.bf16.mxu0 0
    %1082 = vmatpush1.bf16.msra.mxu0 %v922
    %1083 = vmatprep.subr.bf16.mxu0 0
    %1084 = vmatpush1.bf16.msra.mxu0 0
    %1085 = vmatprep.subr.bf16.mxu0 0
    %1086 = vmatpush1.bf16.msra.mxu0 0
    %1087 = vmatprep.subr.bf16.mxu0 0
    %1088 = vmatpush1.bf16.msra.mxu0 0
    %1089 = vmatprep.subr.bf16.mxu0 0
    %1090 = vmatpush1.bf16.msra.mxu0 0
    %1091 = vmatprep.subr.bf16.mxu0 0
    %1092 = vmatpush1.bf16.msra.mxu0 0
    %1093 = vmatprep.subr.bf16.mxu0 0
    %1094 = vmatpush1.bf16.msra.mxu0 0
    %1095 = vmatprep.subr.bf16.mxu0 0
    %1096 = vmatpush1.bf16.msra.mxu0 0
    %1097 = vmatprep.subr.bf16.mxu0 0
    %1098 = vmatpush1.bf16.msra.mxu0 0
    %1099 = vmatprep.subr.bf16.mxu0 0
    %1100 = vmatpush1.bf16.msra.mxu0 0
    %1101 = vmatprep.subr.bf16.mxu0 0
    %1102 = vmatpush1.bf16.msra.mxu0 0
    %1103 = vmatprep.subr.bf16.mxu0 0
    %1104 = vmatpush1.bf16.msra.mxu0 0
    %1105 = vmatprep.subr.bf16.mxu0 0
    %1106 = vmatpush1.bf16.msra.mxu0 0
    %1107 = vmatprep.subr.bf16.mxu0 0
    %1108 = vmatpush1.bf16.msra.mxu0 0
    %1109 = vmatprep.subr.bf16.mxu0 0
    %1110 = vmatpush1.bf16.msra.mxu0 0
    %1111 = vmatprep.mubr.bf16.mxu0 0
    %1112 = vmatmul.mubr.bf16.gmra.mrb[0].mxu0 %v1077
    %v1113 = vpop.f32.mrb[0].mxu0
    %v1114 = vadd.f32 0.0, %v1113
    %v1115 = vpop.f32.mrb[0].mxu0
    %v1116 = vpop.f32.mrb[0].mxu0
    %v1117 = vpop.f32.mrb[0].mxu0
    %1118 = vdwg.mxu0
    %v1119 = vadd.f32 %v1071, %v1114
    %v1120 = vmul.f32 %v1119, %v44
    %v1121 = vtanh.pop %v1120
    %v1122 = vmul.f32 %v1121, %v44
    %v1123 = vadd.f32 %v1122, %v45
    %v1124 = vmul.f32 %v1123, %v1057
    %1126 = vrot.lane.b32.xlu0 %v1123, 64
    %v1127 = vpop.permute.xlu0 %1126
    %v1129 = vmul.f32 %v1123, %v1127
    %1131 = vrot.lane.b32.xlu0 %v1129, 32
    %v1132 = vpop.permute.xlu0 %1131
    %v1134 = vadd.f32 %v1124, %v1132
    %v1135 = vtanh.pop %v1134
    %1137 = vrot.lane.b32.xlu0 %v1135, 64
    %v1138 = vpop.permute.xlu0 %1137
    %v1140 = vmul.f32 %v1123, %v1138
    %vm1141 = vcmp.eq.s32.totalorder %v38, 2
    %v1142 = vsel %vm1141, 1, 0
    %1143 = vset.pattern.permute.xlu0 0
    %1144 = vperm.xlu0 %1143, %v1142
    %v1145 = vpop.permute.xlu0 %1144
    %vm1146 = vcmp.eq.s32.totalorder %v1145, 1
    %v1147 = vsel %vm1146, %v1140, %v1070
    %v1148 = vld [vmem:[#allocation2 + $0x18] sm:$0xff]
    %v1149 = vpack.c.bf16 %v1140, %v1140
    %1151 = vrot.lane.b32.xlu0 %v1149, 32
    %v1152 = vpop.permute.xlu0 %1151
    %v1154 = vsel %vm192, %v1152, 0
    %1156 = vmatprep.subr.bf16.mxu0 0
    %1157 = vmatpush1.bf16.msra.mxu0 %v921
    %1158 = vmatprep.subr.bf16.mxu0 0
    %1159 = vmatpush1.bf16.msra.mxu0 %v922
    %1160 = vmatprep.subr.bf16.mxu0 0
    %1161 = vmatpush1.bf16.msra.mxu0 0
    %1162 = vmatprep.subr.bf16.mxu0 0
    %1163 = vmatpush1.bf16.msra.mxu0 0
    %1164 = vmatprep.subr.bf16.mxu0 0
    %1165 = vmatpush1.bf16.msra.mxu0 0
    %1166 = vmatprep.subr.bf16.mxu0 0
    %1167 = vmatpush1.bf16.msra.mxu0 0
    %1168 = vmatprep.subr.bf16.mxu0 0
    %1169 = vmatpush1.bf16.msra.mxu0 0
    %1170 = vmatprep.subr.bf16.mxu0 0
    %1171 = vmatpush1.bf16.msra.mxu0 0
    %1172 = vmatprep.subr.bf16.mxu0 0
    %1173 = vmatpush1.bf16.msra.mxu0 0
    %1174 = vmatprep.subr.bf16.mxu0 0
    %1175 = vmatpush1.bf16.msra.mxu0 0
    %1176 = vmatprep.subr.bf16.mxu0 0
    %1177 = vmatpush1.bf16.msra.mxu0 0
    %1178 = vmatprep.subr.bf16.mxu0 0
    %1179 = vmatpush1.bf16.msra.mxu0 0
    %1180 = vmatprep.subr.bf16.mxu0 0
    %1181 = vmatpush1.bf16.msra.mxu0 0
    %1182 = vmatprep.subr.bf16.mxu0 0
    %1183 = vmatpush1.bf16.msra.mxu0 0
    %1184 = vmatprep.subr.bf16.mxu0 0
    %1185 = vmatpush1.bf16.msra.mxu0 0
    %1186 = vmatprep.subr.bf16.mxu0 0
    %1187 = vmatpush1.bf16.msra.mxu0 0
    %1188 = vmatprep.mubr.bf16.mxu0 0
    %1189 = vmatmul.mubr.bf16.gmra.mrb[0].mxu0 %v1154
    %v1190 = vpop.f32.mrb[0].mxu0
    %v1191 = vadd.f32 0.0, %v1190
    %v1192 = vpop.f32.mrb[0].mxu0
    %v1193 = vpop.f32.mrb[0].mxu0
    %v1194 = vpop.f32.mrb[0].mxu0
    %1195 = vdwg.mxu0
    %v1196 = vadd.f32 %v1148, %v1191
    %v1197 = vmul.f32 %v1196, %v44
    %v1198 = vtanh.pop %v1197
    %v1199 = vmul.f32 %v1198, %v44
    %v1200 = vadd.f32 %v1199, %v45
    %v1201 = vmul.f32 %v1200, %v1134
    %1203 = vrot.lane.b32.xlu0 %v1200, 64
    %v1204 = vpop.permute.xlu0 %1203
    %v1206 = vmul.f32 %v1200, %v1204
    %1208 = vrot.lane.b32.xlu0 %v1206, 32
    %v1209 = vpop.permute.xlu0 %1208
    %v1211 = vadd.f32 %v1201, %v1209
    %v1212 = vtanh.pop %v1211
    %1214 = vrot.lane.b32.xlu0 %v1212, 64
    %v1215 = vpop.permute.xlu0 %1214
    %v1217 = vmul.f32 %v1200, %v1215
    %vm1218 = vcmp.eq.s32.totalorder %v38, 3
    %v1219 = vsel %vm1218, 1, 0
    %1220 = vset.pattern.permute.xlu0 0
    %1221 = vperm.xlu0 %1220, %v1219
    %v1222 = vpop.permute.xlu0 %1221
    %vm1223 = vcmp.eq.s32.totalorder %v1222, 1
    %v1224 = vsel %vm1223, %v1217, %v1147
    %v1225 = vld [vmem:[#allocation2 + $0x20] sm:$0xff]
    %v1226 = vpack.c.bf16 %v1217, %v1217
    %1228 = vrot.lane.b32.xlu0 %v1226, 32
    %v1229 = vpop.permute.xlu0 %1228
    %v1231 = vsel %vm192, %v1229, 0
    %1233 = vmatprep.subr.bf16.mxu0 0
    %1234 = vmatpush1.bf16.msra.mxu0 %v921
    %1235 = vmatprep.subr.bf16.mxu0 0
    %1236 = vmatpush1.bf16.msra.mxu0 %v922
    %1237 = vmatprep.subr.bf16.mxu0 0
    %1238 = vmatpush1.bf16.msra.mxu0 0
    %1239 = vmatprep.subr.bf16.mxu0 0
    %1240 = vmatpush1.bf16.msra.mxu0 0
    %1241 = vmatprep.subr.bf16.mxu0 0
    %1242 = vmatpush1.bf16.msra.mxu0 0
    %1243 = vmatprep.subr.bf16.mxu0 0
    %1244 = vmatpush1.bf16.msra.mxu0 0
    %1245 = vmatprep.subr.bf16.mxu0 0
    %1246 = vmatpush1.bf16.msra.mxu0 0
    %1247 = vmatprep.subr.bf16.mxu0 0
    %1248 = vmatpush1.bf16.msra.mxu0 0
    %1249 = vmatprep.subr.bf16.mxu0 0
    %1250 = vmatpush1.bf16.msra.mxu0 0
    %1251 = vmatprep.subr.bf16.mxu0 0
    %1252 = vmatpush1.bf16.msra.mxu0 0
    %1253 = vmatprep.subr.bf16.mxu0 0
    %1254 = vmatpush1.bf16.msra.mxu0 0
    %1255 = vmatprep.subr.bf16.mxu0 0
    %1256 = vmatpush1.bf16.msra.mxu0 0
    %1257 = vmatprep.subr.bf16.mxu0 0
    %1258 = vmatpush1.bf16.msra.mxu0 0
    %1259 = vmatprep.subr.bf16.mxu0 0
    %1260 = vmatpush1.bf16.msra.mxu0 0
    %1261 = vmatprep.subr.bf16.mxu0 0
    %1262 = vmatpush1.bf16.msra.mxu0 0
    %1263 = vmatprep.subr.bf16.mxu0 0
    %1264 = vmatpush1.bf16.msra.mxu0 0
    %1265 = vmatprep.mubr.bf16.mxu0 0
    %1266 = vmatmul.mubr.bf16.gmra.mrb[0].mxu0 %v1231
    %v1267 = vpop.f32.mrb[0].mxu0
    %v1268 = vadd.f32 0.0, %v1267
    %v1269 = vpop.f32.mrb[0].mxu0
    %v1270 = vpop.f32.mrb[0].mxu0
    %v1271 = vpop.f32.mrb[0].mxu0
    %1272 = vdwg.mxu0
    %v1273 = vadd.f32 %v1225, %v1268
    %v1274 = vmul.f32 %v1273, %v44
    %v1275 = vtanh.pop %v1274
    %v1276 = vmul.f32 %v1275, %v44
    %v1277 = vadd.f32 %v1276, %v45
    %v1278 = vmul.f32 %v1277, %v1211
    %1280 = vrot.lane.b32.xlu0 %v1277, 64
    %v1281 = vpop.permute.xlu0 %1280
    %v1283 = vmul.f32 %v1277, %v1281
    %1285 = vrot.lane.b32.xlu0 %v1283, 32
    %v1286 = vpop.permute.xlu0 %1285
    %v1288 = vadd.f32 %v1278, %v1286
    %v1289 = vtanh.pop %v1288
    %1291 = vrot.lane.b32.xlu0 %v1289, 64
    %v1292 = vpop.permute.xlu0 %1291
    %v1294 = vmul.f32 %v1277, %v1292
    %vm1295 = vcmp.eq.s32.totalorder %v38, 4
    %v1296 = vsel %vm1295, 1, 0
    %1297 = vset.pattern.permute.xlu0 0
    %1298 = vperm.xlu0 %1297, %v1296
    %v1299 = vpop.permute.xlu0 %1298
    %vm1300 = vcmp.eq.s32.totalorder %v1299, 1
    %v1301 = vsel %vm1300, %v1294, %v1224
    %v1302 = vld [vmem:[#allocation2 + $0x28] sm:$0xff]
    %v1303 = vpack.c.bf16 %v1294, %v1294
    %1305 = vrot.lane.b32.xlu0 %v1303, 32
    %v1306 = vpop.permute.xlu0 %1305
    %v1308 = vsel %vm192, %v1306, 0
    %1310 = vmatprep.subr.bf16.mxu0 0
    %1311 = vmatpush1.bf16.msra.mxu0 %v921
    %1312 = vmatprep.subr.bf16.mxu0 0
    %1313 = vmatpush1.bf16.msra.mxu0 %v922
    %1314 = vmatprep.subr.bf16.mxu0 0
    %1315 = vmatpush1.bf16.msra.mxu0 0
    %1316 = vmatprep.subr.bf16.mxu0 0
    %1317 = vmatpush1.bf16.msra.mxu0 0
    %1318 = vmatprep.subr.bf16.mxu0 0
    %1319 = vmatpush1.bf16.msra.mxu0 0
    %1320 = vmatprep.subr.bf16.mxu0 0
    %1321 = vmatpush1.bf16.msra.mxu0 0
    %1322 = vmatprep.subr.bf16.mxu0 0
    %1323 = vmatpush1.bf16.msra.mxu0 0
    %1324 = vmatprep.subr.bf16.mxu0 0
    %1325 = vmatpush1.bf16.msra.mxu0 0
    %1326 = vmatprep.subr.bf16.mxu0 0
    %1327 = vmatpush1.bf16.msra.mxu0 0
    %1328 = vmatprep.subr.bf16.mxu0 0
    %1329 = vmatpush1.bf16.msra.mxu0 0
    %1330 = vmatprep.subr.bf16.mxu0 0
    %1331 = vmatpush1.bf16.msra.mxu0 0
    %1332 = vmatprep.subr.bf16.mxu0 0
    %1333 = vmatpush1.bf16.msra.mxu0 0
    %1334 = vmatprep.subr.bf16.mxu0 0
    %1335 = vmatpush1.bf16.msra.mxu0 0
    %1336 = vmatprep.subr.bf16.mxu0 0
    %1337 = vmatpush1.bf16.msra.mxu0 0
    %1338 = vmatprep.subr.bf16.mxu0 0
    %1339 = vmatpush1.bf16.msra.mxu0 0
    %1340 = vmatprep.subr.bf16.mxu0 0
    %1341 = vmatpush1.bf16.msra.mxu0 0
    %1342 = vmatprep.mubr.bf16.mxu0 0
    %1343 = vmatmul.mubr.bf16.gmra.mrb[0].mxu0 %v1308
    %v1344 = vpop.f32.mrb[0].mxu0
    %v1345 = vadd.f32 0.0, %v1344
    %v1346 = vpop.f32.mrb[0].mxu0
    %v1347 = vpop.f32.mrb[0].mxu0
    %v1348 = vpop.f32.mrb[0].mxu0
    %1349 = vdwg.mxu0
    %v1350 = vadd.f32 %v1302, %v1345
    %v1351 = vmul.f32 %v1350, %v44
    %v1352 = vtanh.pop %v1351
    %v1353 = vmul.f32 %v1352, %v44
    %v1354 = vadd.f32 %v1353, %v45
    %v1355 = vmul.f32 %v1354, %v1288
    %1357 = vrot.lane.b32.xlu0 %v1354, 64
    %v1358 = vpop.permute.xlu0 %1357
    %v1360 = vmul.f32 %v1354, %v1358
    %1362 = vrot.lane.b32.xlu0 %v1360, 32
    %v1363 = vpop.permute.xlu0 %1362
    %v1365 = vadd.f32 %v1355, %v1363
    %v1366 = vtanh.pop %v1365
    %1368 = vrot.lane.b32.xlu0 %v1366, 64
    %v1369 = vpop.permute.xlu0 %1368
    %v1371 = vmul.f32 %v1354, %v1369
    %vm1372 = vcmp.eq.s32.totalorder %v38, 5
    %v1373 = vsel %vm1372, 1, 0
    %1374 = vset.pattern.permute.xlu0 0
    %1375 = vperm.xlu0 %1374, %v1373
    %v1376 = vpop.permute.xlu0 %1375
    %vm1377 = vcmp.eq.s32.totalorder %v1376, 1
    %v1378 = vsel %vm1377, %v1371, %v1301
    %v1379 = vld [vmem:[#allocation2 + $0x30] sm:$0xff]
    %v1380 = vpack.c.bf16 %v1371, %v1371
    %1382 = vrot.lane.b32.xlu0 %v1380, 32
    %v1383 = vpop.permute.xlu0 %1382
    %v1385 = vsel %vm192, %v1383, 0
    %1387 = vmatprep.subr.bf16.mxu0 0
    %1388 = vmatpush1.bf16.msra.mxu0 %v921
    %1389 = vmatprep.subr.bf16.mxu0 0
    %1390 = vmatpush1.bf16.msra.mxu0 %v922
    %1391 = vmatprep.subr.bf16.mxu0 0
    %1392 = vmatpush1.bf16.msra.mxu0 0
    %1393 = vmatprep.subr.bf16.mxu0 0
    %1394 = vmatpush1.bf16.msra.mxu0 0
    %1395 = vmatprep.subr.bf16.mxu0 0
    %1396 = vmatpush1.bf16.msra.mxu0 0
    %1397 = vmatprep.subr.bf16.mxu0 0
    %1398 = vmatpush1.bf16.msra.mxu0 0
    %1399 = vmatprep.subr.bf16.mxu0 0
    %1400 = vmatpush1.bf16.msra.mxu0 0
    %1401 = vmatprep.subr.bf16.mxu0 0
    %1402 = vmatpush1.bf16.msra.mxu0 0
    %1403 = vmatprep.subr.bf16.mxu0 0
    %1404 = vmatpush1.bf16.msra.mxu0 0
    %1405 = vmatprep.subr.bf16.mxu0 0
    %1406 = vmatpush1.bf16.msra.mxu0 0
    %1407 = vmatprep.subr.bf16.mxu0 0
    %1408 = vmatpush1.bf16.msra.mxu0 0
    %1409 = vmatprep.subr.bf16.mxu0 0
    %1410 = vmatpush1.bf16.msra.mxu0 0
    %1411 = vmatprep.subr.bf16.mxu0 0
    %1412 = vmatpush1.bf16.msra.mxu0 0
    %1413 = vmatprep.subr.bf16.mxu0 0
    %1414 = vmatpush1.bf16.msra.mxu0 0
    %1415 = vmatprep.subr.bf16.mxu0 0
    %1416 = vmatpush1.bf16.msra.mxu0 0
    %1417 = vmatprep.subr.bf16.mxu0 0
    %1418 = vmatpush1.bf16.msra.mxu0 0
    %1419 = vmatprep.mubr.bf16.mxu0 0
    %1420 = vmatmul.mubr.bf16.gmra.mrb[0].mxu0 %v1385
    %v1421 = vpop.f32.mrb[0].mxu0
    %v1422 = vadd.f32 0.0, %v1421
    %v1423 = vpop.f32.mrb[0].mxu0
    %v1424 = vpop.f32.mrb[0].mxu0
    %v1425 = vpop.f32.mrb[0].mxu0
    %1426 = vdwg.mxu0
    %v1427 = vadd.f32 %v1379, %v1422
    %v1428 = vmul.f32 %v1427, %v44
    %v1429 = vtanh.pop %v1428
    %v1430 = vmul.f32 %v1429, %v44
    %v1431 = vadd.f32 %v1430, %v45
    %v1432 = vmul.f32 %v1431, %v1365
    %1434 = vrot.lane.b32.xlu0 %v1431, 64
    %v1435 = vpop.permute.xlu0 %1434
    %v1437 = vmul.f32 %v1431, %v1435
    %1439 = vrot.lane.b32.xlu0 %v1437, 32
    %v1440 = vpop.permute.xlu0 %1439
    %v1442 = vadd.f32 %v1432, %v1440
    %v1443 = vtanh.pop %v1442
    %1445 = vrot.lane.b32.xlu0 %v1443, 64
    %v1446 = vpop.permute.xlu0 %1445
    %v1448 = vmul.f32 %v1431, %v1446
    %vm1449 = vcmp.eq.s32.totalorder %v38, 6
    %v1450 = vsel %vm1449, 1, 0
    %1451 = vset.pattern.permute.xlu0 0
    %1452 = vperm.xlu0 %1451, %v1450
    %v1453 = vpop.permute.xlu0 %1452
    %vm1454 = vcmp.eq.s32.totalorder %v1453, 1
    %v1455 = vsel %vm1454, %v1448, %v1378
    %v1456 = vld [vmem:[#allocation2 + $0x38] sm:$0xff]
    %v1457 = vpack.c.bf16 %v1448, %v1448
    %1459 = vrot.lane.b32.xlu0 %v1457, 32
    %v1460 = vpop.permute.xlu0 %1459
    %v1462 = vsel %vm192, %v1460, 0
    %1464 = vmatprep.subr.bf16.mxu0 0
    %1465 = vmatpush1.bf16.msra.mxu0 %v921
    %1466 = vmatprep.subr.bf16.mxu0 0
    %1467 = vmatpush1.bf16.msra.mxu0 %v922
    %1468 = vmatprep.subr.bf16.mxu0 0
    %1469 = vmatpush1.bf16.msra.mxu0 0
    %1470 = vmatprep.subr.bf16.mxu0 0
    %1471 = vmatpush1.bf16.msra.mxu0 0
    %1472 = vmatprep.subr.bf16.mxu0 0
    %1473 = vmatpush1.bf16.msra.mxu0 0
    %1474 = vmatprep.subr.bf16.mxu0 0
    %1475 = vmatpush1.bf16.msra.mxu0 0
    %1476 = vmatprep.subr.bf16.mxu0 0
    %1477 = vmatpush1.bf16.msra.mxu0 0
    %1478 = vmatprep.subr.bf16.mxu0 0
    %1479 = vmatpush1.bf16.msra.mxu0 0
    %1480 = vmatprep.subr.bf16.mxu0 0
    %1481 = vmatpush1.bf16.msra.mxu0 0
    %1482 = vmatprep.subr.bf16.mxu0 0
    %1483 = vmatpush1.bf16.msra.mxu0 0
    %1484 = vmatprep.subr.bf16.mxu0 0
    %1485 = vmatpush1.bf16.msra.mxu0 0
    %1486 = vmatprep.subr.bf16.mxu0 0
    %1487 = vmatpush1.bf16.msra.mxu0 0
    %1488 = vmatprep.subr.bf16.mxu0 0
    %1489 = vmatpush1.bf16.msra.mxu0 0
    %1490 = vmatprep.subr.bf16.mxu0 0
    %1491 = vmatpush1.bf16.msra.mxu0 0
    %1492 = vmatprep.subr.bf16.mxu0 0
    %1493 = vmatpush1.bf16.msra.mxu0 0
    %1494 = vmatprep.subr.bf16.mxu0 0
    %1495 = vmatpush1.bf16.msra.mxu0 0
    %1496 = vmatprep.mubr.bf16.mxu0 0
    %1497 = vmatmul.mubr.bf16.gmra.mrb[0].mxu0 %v1462
    %v1498 = vpop.f32.mrb[0].mxu0
    %v1499 = vadd.f32 0.0, %v1498
    %v1500 = vpop.f32.mrb[0].mxu0
    %v1501 = vpop.f32.mrb[0].mxu0
    %v1502 = vpop.f32.mrb[0].mxu0
    %1503 = vdwg.mxu0
    %v1504 = vadd.f32 %v1456, %v1499
    %v1505 = vmul.f32 %v1504, %v44
    %v1506 = vtanh.pop %v1505
    %v1507 = vmul.f32 %v1506, %v44
    %v1508 = vadd.f32 %v1507, %v45
    %v1509 = vmul.f32 %v1508, %v1442
    %1511 = vrot.lane.b32.xlu0 %v1508, 64
    %v1512 = vpop.permute.xlu0 %1511
    %v1514 = vmul.f32 %v1508, %v1512
    %1516 = vrot.lane.b32.xlu0 %v1514, 32
    %v1517 = vpop.permute.xlu0 %1516
    %v1519 = vadd.f32 %v1509, %v1517
    %v1520 = vtanh.pop %v1519
    %1522 = vrot.lane.b32.xlu0 %v1520, 64
    %v1523 = vpop.permute.xlu0 %1522
    %v1525 = vmul.f32 %v1508, %v1523
    %vm1526 = vcmp.eq.s32.totalorder %v38, 7
    %v1527 = vsel %vm1526, 1, 0
    %1528 = vset.pattern.permute.xlu0 0
    %1529 = vperm.xlu0 %1528, %v1527
    %v1530 = vpop.permute.xlu0 %1529
    %vm1531 = vcmp.eq.s32.totalorder %v1530, 1
    %v1532 = vsel %vm1531, %v1525, %v1455
    %v1533 = vld [vmem:[%s8] sm:$0xff]
    %v1534 = vld [vmem:[%s8 + $0x8] sm:$0xff]
    %v1535 = vld [vmem:[%s8 + $0x10] sm:$0xff]
    %v1536 = vld [vmem:[%s8 + $0x18] sm:$0xff]
    %v1537 = vld [vmem:[%s9] sm:$0x1]
    %v1539 = vlaneseq
    %v1540 = vshrl.u32 %v1539, 7
    %v1541 = vsub.s32 0, %v1540
    %v1542 = vrot.slane %v1537, %v1541
    %1545 = vrot.lane.b32.xlu0 %v1532, 32
    %v1546 = vpop.permute.xlu0 %1545
    %v1547 = vsel %vm192, %v1546, 0
    %1549 = vmatprep.subr.mxu0 0.0
    %1550 = vmatpush1.msra.mxu0 %v1533
    %1551 = vmatprep.subr.mxu0 0.0
    %1552 = vmatpush1.msra.mxu0 %v1534
    %1553 = vmatprep.subr.mxu0 0.0
    %1554 = vmatpush1.msra.mxu0 %v1535
    %1555 = vmatprep.subr.mxu0 0.0
    %1556 = vmatpush1.msra.mxu0 %v1536
    %1557 = vmatprep.subr.mxu0 0.0
    %1558 = vmatpush1.msra.mxu0 0.0
    %1559 = vmatprep.subr.mxu0 0.0
    %1560 = vmatpush1.msra.mxu0 0.0
    %1561 = vmatprep.subr.mxu0 0.0
    %1562 = vmatpush1.msra.mxu0 0.0
    %1563 = vmatprep.subr.mxu0 0.0
    %1564 = vmatpush1.msra.mxu0 0.0
    %1565 = vmatprep.subr.mxu0 0.0
    %1566 = vmatpush1.msra.mxu0 0.0
    %1567 = vmatprep.subr.mxu0 0.0
    %1568 = vmatpush1.msra.mxu0 0.0
    %1569 = vmatprep.subr.mxu0 0.0
    %1570 = vmatpush1.msra.mxu0 0.0
    %1571 = vmatprep.subr.mxu0 0.0
    %1572 = vmatpush1.msra.mxu0 0.0
    %1573 = vmatprep.subr.mxu0 0.0
    %1574 = vmatpush1.msra.mxu0 0.0
    %1575 = vmatprep.subr.mxu0 0.0
    %1576 = vmatpush1.msra.mxu0 0.0
    %1577 = vmatprep.subr.mxu0 0.0
    %1578 = vmatpush1.msra.mxu0 0.0
    %1579 = vmatprep.subr.mxu0 0.0
    %1580 = vmatpush1.msra.mxu0 0.0
    %1581 = vmatprep.subr.mxu0 0.0
    %1582 = vmatpush1.msra.mxu0 0.0
    %1583 = vmatprep.subr.mxu0 0.0
    %1584 = vmatpush1.msra.mxu0 0.0
    %1585 = vmatprep.subr.mxu0 0.0
    %1586 = vmatpush1.msra.mxu0 0.0
    %1587 = vmatprep.subr.mxu0 0.0
    %1588 = vmatpush1.msra.mxu0 0.0
    %1589 = vmatprep.subr.mxu0 0.0
    %1590 = vmatpush1.msra.mxu0 0.0
    %1591 = vmatprep.subr.mxu0 0.0
    %1592 = vmatpush1.msra.mxu0 0.0
    %1593 = vmatprep.subr.mxu0 0.0
    %1594 = vmatpush1.msra.mxu0 0.0
    %1595 = vmatprep.subr.mxu0 0.0
    %1596 = vmatpush1.msra.mxu0 0.0
    %1597 = vmatprep.subr.mxu0 0.0
    %1598 = vmatpush1.msra.mxu0 0.0
    %1599 = vmatprep.subr.mxu0 0.0
    %1600 = vmatpush1.msra.mxu0 0.0
    %1601 = vmatprep.subr.mxu0 0.0
    %1602 = vmatpush1.msra.mxu0 0.0
    %1603 = vmatprep.subr.mxu0 0.0
    %1604 = vmatpush1.msra.mxu0 0.0
    %1605 = vmatprep.subr.mxu0 0.0
    %1606 = vmatpush1.msra.mxu0 0.0
    %1607 = vmatprep.subr.mxu0 0.0
    %1608 = vmatpush1.msra.mxu0 0.0
    %1609 = vmatprep.subr.mxu0 0.0
    %1610 = vmatpush1.msra.mxu0 0.0
    %1611 = vmatprep.subr.mxu0 0.0
    %1612 = vmatpush1.msra.mxu0 0.0
    %1613 = vmatprep.mubr.f32.mxu0 0.0
    %1614 = vmatmul.mubr.f32.gmra.mrb[0].mxu0 %v1547
    %v1615 = vpop.f32.mrb[0].mxu0
    %v1616 = vadd.f32 %v1542, %v1615
    %v1617 = vpop.f32.mrb[0].mxu0
    %1618 = vdwg.mxu0
    %vm1619 = vcmask 64512
    %1620 = vst.msk [vmem:[#allocation4] sm:$0xff] %vm1619, %v1616
    // Predicated region
    $region42: #{tpu_custom_call.1} parent=1 // pred_check
      _
    $region43: #{tpu_custom_call.1} parent=1 // pred_check_branch
      %1622 = sbr.rel (0) target = $region45
    $region44: #{tpu_custom_call.1} parent=1 // pred_region
      %s1624 = ssub.s32 128, 128
      %1625 = vsyncadd [#allocation5], %s1624
      %s1627 = sshll.u32 [#allocation4], 4
      %s1628 = int_to_ptr.vmem [resolvable:$true] %s1627
      %1630 = dma.vmem_to_hbm [thread:$0]  %s1628, 128, %s10, [#allocation5]
    $region45: #{tpu_custom_call.1} parent=1 // pred_fallthru
      _
    // Predicated region
    $region46: #{tpu_custom_call.1} parent=1 // pred_check
      _
    $region47: #{tpu_custom_call.1} parent=1 // pred_check_branch
      %1632 = sbr.rel (0) target = $region49
    $region48: #{tpu_custom_call.1} parent=1 // pred_region
      %1633 = dma.done [#allocation5], 128
    $region49: #{tpu_custom_call.1} parent=1 // pred_fallthru
      _
    %1634 = vsyncpa [#allocation5], 1

</llo_original>
